<compile_context>
chip_gen: v7x
topology: tpu7x:2x2x1
jax: 0.10.0
libtpu: 0.0.40
codegen_flags: <defaults>
</compile_context>

<pallas_src>
import numpy as np
import jax
import jax.numpy as jnp
from jax.experimental import pallas as pl
from jax.experimental.pallas import tpu as pltpu

NEG_SLOPE = 0.01
EPS = 1e-5


# ----------------------------------------------------------------------------
# Static (shape-only) interpolation matrix for x2 bilinear, align_corners=True.
# ----------------------------------------------------------------------------
def _upsample_matrix(L, Lo):
    """U (Lo, L) such that up[o] = sum_i U[o, i] * x[i]."""
    s = np.arange(Lo, dtype=np.float64) * ((L - 1) / (Lo - 1))
    i0 = np.clip(np.floor(s).astype(np.int64), 0, L - 1)
    i1 = np.minimum(i0 + 1, L - 1)
    f = s - i0
    U = np.zeros((Lo, L), np.float64)
    U[np.arange(Lo), i0] += 1.0 - f
    U[np.arange(Lo), i1] += f
    return U.astype(np.float32)


# ----------------------------------------------------------------------------
# Kernel 1: fused  upsample-x2 + zero-pad + 3x3 conv + bias  (all on the MXU)
#           plus per-batch BN partial sums.  grid = (N,), fully parallel.
#
#   x_ref : (1, H, W*Cin)            channel-interleaved pre-upsample rows
#   r_ref : (W*Cin, (Wo+2)*Cin)      W-upsample + W-pad (channel block-diagonal)
#   a_ref : (3, Ho, H)               H-upsample + H-pad + conv row-shift ky
#   m_ref : (3, (Wo+2)*Cin, Cout*Wo) Toeplitz conv weights (deep contraction)
#   b_ref : (1, Cout*Wo)             bias, lane layout co*Wo + xo
#   y_ref : (1, Ho, Cout*Wo)         conv output, lane-dense
#   ps/pq : (1, 1, Cout*Wo)          per-batch partial sum / sum-of-squares
# ----------------------------------------------------------------------------
def conv_stats_kernel(x_ref, r_ref, a_ref, m_ref, b_ref, y_ref, ps_ref, pq_ref):
    xf = x_ref[0]                                                    # (H, W*Cin)
    # W-direction upsample + pad, channels stay interleaved on the lane axis.
    xwp = jnp.dot(xf, r_ref[...], preferred_element_type=jnp.float32)  # (H, (Wo+2)*Cin)

    acc = None
    for ky in range(3):
        # conv over (kx, ci) at original H resolution: contraction depth (Wo+2)*Cin
        t = jnp.dot(xwp, m_ref[ky], preferred_element_type=jnp.float32)     # (H, Cout*Wo)
        # H-direction upsample + pad + row shift ky (linear, so it commutes).
        term = jnp.dot(a_ref[ky], t, preferred_element_type=jnp.float32)    # (Ho, Cout*Wo)
        acc = term if acc is None else acc + term

    y = acc + b_ref[...]                                             # (Ho, Cout*Wo)
    y_ref[0] = y
    ps_ref[0] = jnp.sum(y, axis=0, keepdims=True)
    pq_ref[0] = jnp.sum(y * y, axis=0, keepdims=True)


# ----------------------------------------------------------------------------
# Kernel 2: BN affine (precomputed lane-dense scale/shift) + LeakyReLU, and the
#           NHWC->NCHW de-interleave fused into the store (per-channel slices).
# ----------------------------------------------------------------------------
def bn_lrelu_nchw_kernel(y_ref, scale_ref, shift_ref, o_ref):
    z = y_ref[0] * scale_ref[...] + shift_ref[...]                   # (Ho, Cout*Wo)
    z = jnp.where(z >= 0, z, NEG_SLOPE * z)
    cout, wo = o_ref.shape[1], o_ref.shape[3]
    for c in range(cout):
        o_ref[0, c] = z[:, c * wo:(c + 1) * wo]                      # (Ho, Wo) per channel


# ----------------------------------------------------------------------------
# Wrapper
# ----------------------------------------------------------------------------
def up_forward(x_nchw, conv_w, conv_b, bn_gamma, bn_beta):
    N, Cin, H, W = x_nchw.shape
    Cout = conv_w.shape[0]
    Ho, Wo = 2 * H, 2 * W
    WCin = W * Cin
    WpCin = (Wo + 2) * Cin          # W-upsampled + padded, channel interleaved
    CWo = Cout * Wo                 # lane-dense row width, lane = co*Wo + xo

    # Layout: NCHW -> (N, H, W*Cin).  Tiny pre-upsample tensor; one cheap XLA op.
    x2d = jnp.transpose(x_nchw, (0, 2, 3, 1)).reshape(N, H, WCin).astype(jnp.float32)

    # ---- static, shape-only matrices (numpy, baked at trace time) -----------
    U_h = _upsample_matrix(H, Ho)                                   # (Ho, H)
    U_w = _upsample_matrix(W, Wo)                                   # (Wo, W)
    # W upsample + W pad (block diagonal over channels): (W*Cin, (Wo+2)*Cin)
    R = np.concatenate([np.zeros((WCin, Cin), np.float32),
                        np.kron(U_w.T, np.eye(Cin, dtype=np.float32)),
                        np.zeros((WCin, Cin), np.float32)], axis=1)
    # H upsample + H pad + conv row shift: A[ky] = U_hp[ky:ky+Ho]
    U_hp = np.concatenate([np.zeros((1, H), np.float32), U_h,
                           np.zeros((1, H), np.float32)], axis=0)   # (Ho+2, H)
    A = np.stack([U_hp[ky:ky + Ho] for ky in range(3)], axis=0)     # (3, Ho, H)
    # Toeplitz selector E[kx, xp, xo] = (xp == xo + kx)
    E = np.zeros((3, Wo + 2, Wo), np.float32)
    xo_idx = np.arange(Wo)
    for kx in range(3):
        E[kx, xo_idx + kx, xo_idx] = 1.0

    # ---- weight-dependent Toeplitz conv matrices (tiny XLA glue) ------------
    # M[ky, xp*Cin+ci, co*Wo+xo] = w[co, ci, ky, xp-xo]
    M = jnp.einsum("kpx,oiyk->ypiox", jnp.asarray(E), conv_w.astype(jnp.float32))
    M = M.reshape(3, WpCin, CWo)
    b_lane = jnp.repeat(conv_b.astype(jnp.float32), Wo).reshape(1, CWo)

    # ---- kernel 1: fused upsample+pad+conv+bias, per-batch BN partials ------
    y, psum, psq = pl.pallas_call(
        conv_stats_kernel,
        out_shape=(jax.ShapeDtypeStruct((N, Ho, CWo), jnp.float32),
                   jax.ShapeDtypeStruct((N, 1, CWo), jnp.float32),
                   jax.ShapeDtypeStruct((N, 1, CWo), jnp.float32)),
        grid=(N,),
        in_specs=[pl.BlockSpec((1, H, WCin), lambda n: (n, 0, 0)),
                  pl.BlockSpec((WCin, WpCin), lambda n: (0, 0)),
                  pl.BlockSpec((3, Ho, H), lambda n: (0, 0, 0)),
                  pl.BlockSpec((3, WpCin, CWo), lambda n: (0, 0, 0)),
                  pl.BlockSpec((1, CWo), lambda n: (0, 0))],
        out_specs=(pl.BlockSpec((1, Ho, CWo), lambda n: (n, 0, 0)),
                   pl.BlockSpec((1, 1, CWo), lambda n: (n, 0, 0)),
                   pl.BlockSpec((1, 1, CWo), lambda n: (n, 0, 0))),
        compiler_params=pltpu.CompilerParams(dimension_semantics=("parallel",)),
    )(x2d, jnp.asarray(R), jnp.asarray(A), M, b_lane)

    # ---- BN statistics finalization (tiny per-channel scalar glue) ----------
    cnt = float(N * Ho * Wo)
    tot = psum.reshape(N, Cout, Wo).sum(axis=(0, 2))
    totsq = psq.reshape(N, Cout, Wo).sum(axis=(0, 2))
    mean = tot / cnt
    # TODO(synk): E[x^2]-E[x]^2 can cancel for very large N*Ho*Wo; switch to a
    #             two-pass (subtract-mean) variance in that regime.
    var = jnp.maximum(totsq / cnt - mean * mean, 0.0)    # biased (train-mode BN)
    inv_std = jax.lax.rsqrt(var + EPS)
    scale_c = bn_gamma.astype(jnp.float32) * inv_std
    shift_c = bn_beta.astype(jnp.float32) - mean * scale_c
    scale_lane = jnp.repeat(scale_c, Wo).reshape(1, CWo)
    shift_lane = jnp.repeat(shift_c, Wo).reshape(1, CWo)

    # ---- kernel 2: BN affine + LeakyReLU, NCHW output written directly ------
    out = pl.pallas_call(
        bn_lrelu_nchw_kernel,
        out_shape=jax.ShapeDtypeStruct((N, Cout, Ho, Wo), jnp.float32),
        grid=(N,),
        in_specs=[pl.BlockSpec((1, Ho, CWo), lambda n: (n, 0, 0)),
                  pl.BlockSpec((1, CWo), lambda n: (0, 0)),
                  pl.BlockSpec((1, CWo), lambda n: (0, 0))],
        out_specs=pl.BlockSpec((1, Cout, Ho, Wo), lambda n: (n, 0, 0, 0)),
        compiler_params=pltpu.CompilerParams(dimension_semantics=("parallel",)),
    )(y, scale_lane, shift_lane)

    return out


# ----------------------------------------------------------------------------
# Pure-JAX reference (independent of the fused formulation) for checking.
# ----------------------------------------------------------------------------
def bilinear_upsample_x2_align_corners(x_nhwc):
    n, h, w, c = x_nhwc.shape
    ho, wo = 2 * h, 2 * w

    def idx_and_frac(l, lo):
        s = jnp.arange(lo, dtype=jnp.float32) * ((l - 1) / (lo - 1))
        i0 = jnp.clip(jnp.floor(s).astype(jnp.int32), 0, l - 1)
        i1 = jnp.minimum(i0 + 1, l - 1)
        f = s - i0.astype(jnp.float32)
        return i0, i1, f

    y0, y1, fy = idx_and_frac(h, ho)
    x0, x1, fx = idx_and_frac(w, wo)
    top = jnp.take(x_nhwc, y0, axis=1)
    bot = jnp.take(x_nhwc, y1, axis=1)
    xh = top * (1.0 - fy)[None, :, None, None] + bot * fy[None, :, None, None]
    left = jnp.take(xh, x0, axis=2)
    right = jnp.take(xh, x1, axis=2)
    return left * (1.0 - fx)[None, None, :, None] + right * fx[None, None, :, None]


def up_forward_ref(x_nchw, conv_w, conv_b, bn_gamma, bn_beta):
    x = jnp.transpose(x_nchw, (0, 2, 3, 1)).astype(jnp.float32)
    xu = bilinear_upsample_x2_align_corners(x)
    xu_nchw = jnp.transpose(xu, (0, 3, 1, 2))
    y = jax.lax.conv_general_dilated(
        xu_nchw, conv_w, window_strides=(1, 1), padding="SAME",
        dimension_numbers=("NCHW", "OIHW", "NCHW"))
    y = y + conv_b[None, :, None, None]
    mean = jnp.mean(y, axis=(0, 2, 3))
    var = jnp.var(y, axis=(0, 2, 3))            # biased
    yhat = (y - mean[None, :, None, None]) / jnp.sqrt(var + EPS)[None, :, None, None]
    z = yhat * bn_gamma[None, :, None, None] + bn_beta[None, :, None, None]
    return jnp.where(z >= 0, z, NEG_SLOPE * z)


if __name__ == "__main__":
    in_channels, out_channels = 4, 8
    N, H, W = 2, 16, 16

    key = jax.random.PRNGKey(0)
    k_x, k_w, k_b = jax.random.split(key, 3)

    x1 = jax.random.normal(k_x, (N, in_channels, H, W), dtype=jnp.float32)
    conv_w = 0.1 * jax.random.normal(k_w, (out_channels, in_channels, 3, 3),
                                     dtype=jnp.float32)
    conv_b = 0.05 * jax.random.normal(k_b, (out_channels,), dtype=jnp.float32)
    bn_gamma = jnp.ones((out_channels,), jnp.float32)   # fresh BatchNorm2d init
    bn_beta = jnp.zeros((out_channels,), jnp.float32)

    out = jax.block_until_ready(up_forward(x1, conv_w, conv_b, bn_gamma, bn_beta))
    ref = jax.block_until_ready(up_forward_ref(x1, conv_w, conv_b, bn_gamma, bn_beta))

    assert out.shape == (N, out_channels, 2 * H, 2 * W), out.shape
    max_err = float(jnp.max(jnp.abs(out - ref)))
    assert jnp.allclose(out, ref, atol=2e-4, rtol=2e-4), max_err

    print("KERNEL_OK")
</pallas_src>

<mosaic_0001>
module attributes {stable_mosaic.version = 11 : i64} {
  func.func @conv_stats_kernel(%arg0: i32, %arg1: memref<1x16x64xf32, #tpu.memory_space<vmem>>, %arg2: memref<64x136xf32, #tpu.memory_space<vmem>>, %arg3: memref<3x32x16xf32, #tpu.memory_space<vmem>>, %arg4: memref<3x136x256xf32, #tpu.memory_space<vmem>>, %arg5: memref<1x256xf32, #tpu.memory_space<vmem>>, %arg6: memref<1x32x256xf32, #tpu.memory_space<vmem>>, %arg7: memref<1x1x256xf32, #tpu.memory_space<vmem>>, %arg8: memref<1x1x256xf32, #tpu.memory_space<vmem>>) attributes {dimension_semantics = [#tpu.dimension_semantics<parallel>], iteration_bounds = array<i64: 2>, scalar_prefetch = 0 : i64, scratch_operands = 0 : i64, tpu.core_type = #tpu.core_type<tc>, window_params = [{transform_indices = @transform_0, window_bounds = array<i64: 1, 16, 64>}, {pipeline_mode = #tpu.pipeline_mode<synchronous>, transform_indices = @transform_1, window_bounds = array<i64: 64, 136>}, {pipeline_mode = #tpu.pipeline_mode<synchronous>, transform_indices = @transform_2, window_bounds = array<i64: 3, 32, 16>}, {pipeline_mode = #tpu.pipeline_mode<synchronous>, transform_indices = @transform_3, window_bounds = array<i64: 3, 136, 256>}, {pipeline_mode = #tpu.pipeline_mode<synchronous>, transform_indices = @transform_4, window_bounds = array<i64: 1, 256>}, {transform_indices = @transform_5, window_bounds = array<i64: 1, 32, 256>}, {transform_indices = @transform_6, window_bounds = array<i64: 1, 1, 256>}, {transform_indices = @transform_7, window_bounds = array<i64: 1, 1, 256>}]} {
    %c0 = arith.constant 0 : index
    %c0_0 = arith.constant 0 : index
    %c0_1 = arith.constant 0 : index
    %0 = vector.load %arg1[%c0, %c0_0, %c0_1] : memref<1x16x64xf32, #tpu.memory_space<vmem>>, vector<1x16x64xf32>
    %1 = vector.shape_cast %0 : vector<1x16x64xf32> to vector<16x64xf32>
    %c0_2 = arith.constant 0 : index
    %c0_3 = arith.constant 0 : index
    %2 = vector.load %arg2[%c0_2, %c0_3] : memref<64x136xf32, #tpu.memory_space<vmem>>, vector<64x136xf32>
    %cst = arith.constant dense<0.000000e+00> : vector<16x136xf32>
    %3 = tpu.matmul %1, %2, %cst {dimension_numbers = #tpu.dot_dimension_numbers<[1], [0], [0], [1], [0, 0, 1, 1], [], []>} : vector<16x64xf32>, vector<64x136xf32>, vector<16x136xf32> -> vector<16x136xf32>
    %c0_4 = arith.constant 0 : index
    %c0_5 = arith.constant 0 : index
    %c0_6 = arith.constant 0 : index
    %4 = vector.load %arg4[%c0_4, %c0_5, %c0_6] : memref<3x136x256xf32, #tpu.memory_space<vmem>>, vector<1x136x256xf32>
    %5 = vector.shape_cast %4 : vector<1x136x256xf32> to vector<136x256xf32>
    %cst_7 = arith.constant dense<0.000000e+00> : vector<16x256xf32>
    %6 = tpu.matmul %3, %5, %cst_7 {dimension_numbers = #tpu.dot_dimension_numbers<[1], [0], [0], [1], [0, 0, 1, 1], [], []>} : vector<16x136xf32>, vector<136x256xf32>, vector<16x256xf32> -> vector<16x256xf32>
    %c0_8 = arith.constant 0 : index
    %c0_9 = arith.constant 0 : index
    %c0_10 = arith.constant 0 : index
    %7 = vector.load %arg3[%c0_8, %c0_9, %c0_10] : memref<3x32x16xf32, #tpu.memory_space<vmem>>, vector<1x32x16xf32>
    %8 = vector.shape_cast %7 : vector<1x32x16xf32> to vector<32x16xf32>
    %cst_11 = arith.constant dense<0.000000e+00> : vector<32x256xf32>
    %9 = tpu.matmul %8, %6, %cst_11 {dimension_numbers = #tpu.dot_dimension_numbers<[1], [0], [0], [1], [0, 0, 1, 1], [], []>} : vector<32x16xf32>, vector<16x256xf32>, vector<32x256xf32> -> vector<32x256xf32>
    %c1 = arith.constant 1 : index
    %c0_12 = arith.constant 0 : index
    %c0_13 = arith.constant 0 : index
    %10 = vector.load %arg4[%c1, %c0_12, %c0_13] : memref<3x136x256xf32, #tpu.memory_space<vmem>>, vector<1x136x256xf32>
    %11 = vector.shape_cast %10 : vector<1x136x256xf32> to vector<136x256xf32>
    %cst_14 = arith.constant dense<0.000000e+00> : vector<16x256xf32>
    %12 = tpu.matmul %3, %11, %cst_14 {dimension_numbers = #tpu.dot_dimension_numbers<[1], [0], [0], [1], [0, 0, 1, 1], [], []>} : vector<16x136xf32>, vector<136x256xf32>, vector<16x256xf32> -> vector<16x256xf32>
    %c1_15 = arith.constant 1 : index
    %c0_16 = arith.constant 0 : index
    %c0_17 = arith.constant 0 : index
    %13 = vector.load %arg3[%c1_15, %c0_16, %c0_17] : memref<3x32x16xf32, #tpu.memory_space<vmem>>, vector<1x32x16xf32>
    %14 = vector.shape_cast %13 : vector<1x32x16xf32> to vector<32x16xf32>
    %cst_18 = arith.constant dense<0.000000e+00> : vector<32x256xf32>
    %15 = tpu.matmul %14, %12, %cst_18 {dimension_numbers = #tpu.dot_dimension_numbers<[1], [0], [0], [1], [0, 0, 1, 1], [], []>} : vector<32x16xf32>, vector<16x256xf32>, vector<32x256xf32> -> vector<32x256xf32>
    %16 = arith.addf %9, %15 : vector<32x256xf32>
    %c2 = arith.constant 2 : index
    %c0_19 = arith.constant 0 : index
    %c0_20 = arith.constant 0 : index
    %17 = vector.load %arg4[%c2, %c0_19, %c0_20] : memref<3x136x256xf32, #tpu.memory_space<vmem>>, vector<1x136x256xf32>
    %18 = vector.shape_cast %17 : vector<1x136x256xf32> to vector<136x256xf32>
    %cst_21 = arith.constant dense<0.000000e+00> : vector<16x256xf32>
    %19 = tpu.matmul %3, %18, %cst_21 {dimension_numbers = #tpu.dot_dimension_numbers<[1], [0], [0], [1], [0, 0, 1, 1], [], []>} : vector<16x136xf32>, vector<136x256xf32>, vector<16x256xf32> -> vector<16x256xf32>
    %c2_22 = arith.constant 2 : index
    %c0_23 = arith.constant 0 : index
    %c0_24 = arith.constant 0 : index
    %20 = vector.load %arg3[%c2_22, %c0_23, %c0_24] : memref<3x32x16xf32, #tpu.memory_space<vmem>>, vector<1x32x16xf32>
    %21 = vector.shape_cast %20 : vector<1x32x16xf32> to vector<32x16xf32>
    %cst_25 = arith.constant dense<0.000000e+00> : vector<32x256xf32>
    %22 = tpu.matmul %21, %19, %cst_25 {dimension_numbers = #tpu.dot_dimension_numbers<[1], [0], [0], [1], [0, 0, 1, 1], [], []>} : vector<32x16xf32>, vector<16x256xf32>, vector<32x256xf32> -> vector<32x256xf32>
    %23 = arith.addf %16, %22 : vector<32x256xf32>
    %c0_26 = arith.constant 0 : index
    %c0_27 = arith.constant 0 : index
    %24 = vector.load %arg5[%c0_26, %c0_27] : memref<1x256xf32, #tpu.memory_space<vmem>>, vector<1x256xf32>
    %25 = vector.broadcast %24 : vector<1x256xf32> to vector<32x256xf32>
    %26 = arith.addf %23, %25 : vector<32x256xf32>
    %c0_28 = arith.constant 0 : index
    %c0_29 = arith.constant 0 : index
    %c0_30 = arith.constant 0 : index
    %27 = vector.load %arg6[%c0_28, %c0_29, %c0_30] : memref<1x32x256xf32, #tpu.memory_space<vmem>>, vector<1x32x256xf32>
    %28 = vector.shape_cast %27 : vector<1x32x256xf32> to vector<32x256xf32>
    %29 = vector.shape_cast %26 : vector<32x256xf32> to vector<1x32x256xf32>
    tpu.vector_store %arg6[%c0_28, %c0_29, %c0_30], %29 {strides = array<i32>} : memref<1x32x256xf32, #tpu.memory_space<vmem>>, vector<1x32x256xf32>,
    %cst_31 = arith.constant dense<0.000000e+00> : vector<256xf32>
    %30 = vector.multi_reduction <add>, %26, %cst_31 [0] : vector<32x256xf32> to vector<256xf32>
    %31 = vector.shape_cast %30 : vector<256xf32> to vector<1x256xf32>
    %c0_32 = arith.constant 0 : index
    %c0_33 = arith.constant 0 : index
    %c0_34 = arith.constant 0 : index
    %32 = vector.load %arg7[%c0_32, %c0_33, %c0_34] : memref<1x1x256xf32, #tpu.memory_space<vmem>>, vector<1x1x256xf32>
    %33 = vector.shape_cast %32 : vector<1x1x256xf32> to vector<1x256xf32>
    %34 = vector.shape_cast %31 : vector<1x256xf32> to vector<1x1x256xf32>
    tpu.vector_store %arg7[%c0_32, %c0_33, %c0_34], %34 {strides = array<i32>} : memref<1x1x256xf32, #tpu.memory_space<vmem>>, vector<1x1x256xf32>,
    %35 = arith.mulf %26, %26 : vector<32x256xf32>
    %cst_35 = arith.constant dense<0.000000e+00> : vector<256xf32>
    %36 = vector.multi_reduction <add>, %35, %cst_35 [0] : vector<32x256xf32> to vector<256xf32>
    %37 = vector.shape_cast %36 : vector<256xf32> to vector<1x256xf32>
    %c0_36 = arith.constant 0 : index
    %c0_37 = arith.constant 0 : index
    %c0_38 = arith.constant 0 : index
    %38 = vector.load %arg8[%c0_36, %c0_37, %c0_38] : memref<1x1x256xf32, #tpu.memory_space<vmem>>, vector<1x1x256xf32>
    %39 = vector.shape_cast %38 : vector<1x1x256xf32> to vector<1x256xf32>
    %40 = vector.shape_cast %37 : vector<1x256xf32> to vector<1x1x256xf32>
    tpu.vector_store %arg8[%c0_36, %c0_37, %c0_38], %40 {strides = array<i32>} : memref<1x1x256xf32, #tpu.memory_space<vmem>>, vector<1x1x256xf32>,
    return
  }
  func.func @transform_0(%arg0: i32) -> (i32, i32, i32) {
    %c0_i32 = arith.constant 0 : i32
    %c0_i32_0 = arith.constant 0 : i32
    %c0_i32_1 = arith.constant 0 : i32
    return %arg0, %c0_i32, %c0_i32_0 : i32, i32, i32
  }
  func.func @transform_1(%arg0: i32) -> (i32, i32) {
    %c0_i32 = arith.constant 0 : i32
    %c0_i32_0 = arith.constant 0 : i32
    %c0_i32_1 = arith.constant 0 : i32
    return %c0_i32, %c0_i32_0 : i32, i32
  }
  func.func @transform_2(%arg0: i32) -> (i32, i32, i32) {
    %c0_i32 = arith.constant 0 : i32
    %c0_i32_0 = arith.constant 0 : i32
    %c0_i32_1 = arith.constant 0 : i32
    %c0_i32_2 = arith.constant 0 : i32
    return %c0_i32, %c0_i32_0, %c0_i32_1 : i32, i32, i32
  }
  func.func @transform_3(%arg0: i32) -> (i32, i32, i32) {
    %c0_i32 = arith.constant 0 : i32
    %c0_i32_0 = arith.constant 0 : i32
    %c0_i32_1 = arith.constant 0 : i32
    %c0_i32_2 = arith.constant 0 : i32
    return %c0_i32, %c0_i32_0, %c0_i32_1 : i32, i32, i32
  }
  func.func @transform_4(%arg0: i32) -> (i32, i32) {
    %c0_i32 = arith.constant 0 : i32
    %c0_i32_0 = arith.constant 0 : i32
    %c0_i32_1 = arith.constant 0 : i32
    return %c0_i32, %c0_i32_0 : i32, i32
  }
  func.func @transform_5(%arg0: i32) -> (i32, i32, i32) {
    %c0_i32 = arith.constant 0 : i32
    %c0_i32_0 = arith.constant 0 : i32
    %c0_i32_1 = arith.constant 0 : i32
    return %arg0, %c0_i32, %c0_i32_0 : i32, i32, i32
  }
  func.func @transform_6(%arg0: i32) -> (i32, i32, i32) {
    %c0_i32 = arith.constant 0 : i32
    %c0_i32_0 = arith.constant 0 : i32
    %c0_i32_1 = arith.constant 0 : i32
    return %arg0, %c0_i32, %c0_i32_0 : i32, i32, i32
  }
  func.func @transform_7(%arg0: i32) -> (i32, i32, i32) {
    %c0_i32 = arith.constant 0 : i32
    %c0_i32_0 = arith.constant 0 : i32
    %c0_i32_1 = arith.constant 0 : i32
    return %arg0, %c0_i32, %c0_i32_0 : i32, i32, i32
  }
}

</mosaic_0001>

<llo_original>
// kernel: tpu_custom_call.1
$region0: #{tpu_custom_call.1}
  #allocation0 [shape = 'u32[]', space=smem, size = 0x4, offset = 0x4, fixed_abs, tag = 'smem constant byte address 0x4 - core index']
  #allocation1 [shape = 'u32[144,128]{1,0:T(1,128)}', space=vmem, size = 0x12000, scoped, tag = 'internal scratch']
  %s0 = inlined_call_operand.hbm [shape: f32[2,16,64], index: 0, kind: input, shape index: {}]
  %s1 = inlined_call_operand.vmem [shape: f32[64,136], index: 1, kind: input, shape index: {}]
  %s2 = inlined_call_operand.vmem [shape: f32[3,32,16], index: 2, kind: input, shape index: {}]
  %s3 = inlined_call_operand.hbm [shape: f32[3,136,256], index: 3, kind: input, shape index: {}]
  %s4 = inlined_call_operand.vmem [shape: f32[1,256], index: 4, kind: input, shape index: {}]
  %s5 = inlined_call_operand.hbm [shape: f32[2,32,256], index: 5, kind: output, shape index: {0}]
  %s6 = inlined_call_operand.hbm [shape: f32[2,1,256], index: 6, kind: output, shape index: {1}]
  %s7 = inlined_call_operand.hbm [shape: f32[2,1,256], index: 7, kind: output, shape index: {2}]
  %8 = xla_tuple %s5, %s6, %s7
  %s9 = sld [smem:[#allocation0]]
  $region77: #{tpu_custom_call.1} parent=0
    _
  %s11 = ssub.s32 1, %s9
  %s12 = scalar_select 0, %s11, %s9
  $region1: #{tpu_custom_call.1} parent=0
    #allocation2 [shape = 'u8[16384]{0}', space=vmem, size = 0x4000, scoped, tag = 'input window, operand 0']
    #allocation3 [shape = 's32[2]{0}', space=sflag, size = 0x8, scoped, tag = 'scoped memory for tpu_custom_call.1']
    #allocation4 [shape = 's32[2]{0}', space=sflag, size = 0x8, scoped, tag = 'scoped memory for tpu_custom_call.1']
    #allocation5 [shape = 'u8[417792]{0}', space=vmem, size = 0x66000, scoped, tag = 'input window, operand 3, single buffered']
    #allocation6 [shape = 's32[1]{0}', space=sflag, size = 0x4, scoped, tag = 'scoped memory for tpu_custom_call.1']
    #allocation7 [shape = 'u8[65536]{0}', space=vmem, size = 0x10000, scoped, tag = 'output window, operand 0']
    #allocation8 [shape = 'u8[2048]{0}', space=vmem, size = 0x800, scoped, tag = 'output window, operand 1']
    #allocation9 [shape = 's32[2]{0}', space=sflag, size = 0x8, scoped, tag = 'scoped memory for tpu_custom_call.1']
    #allocation10 [shape = 'u8[2048]{0}', space=vmem, size = 0x800, scoped, tag = 'output window, operand 2']
    %13 = vsyncpa [#allocation3], 0
    %s14 = scalar_lea.sflag [#allocation3], 1
    %15 = vsyncpa %s14, 0
    %16 = vsyncpa [#allocation6], 0
    %17 = vsyncpa [#allocation4], 0
    %s18 = scalar_lea.sflag [#allocation4], 1
    %19 = vsyncpa %s18, 0
    %20 = vsyncpa [#allocation9], 0
    %s21 = scalar_lea.sflag [#allocation9], 1
    %22 = vsyncpa %s21, 0
    loop: start=0, step=1, limit=4
    $region2: #{tpu_custom_call.1} parent=1 // loop_pre_header
      _
    $region3: #{tpu_custom_call.1} parent=1 // loop_header
      %s24 = sphi 0, %s28
      %p25 = scmp.ge.s32.totalorder %s24, 4
      %s34 = sphi 0, %s36
      %s37 = sphi 0, %s34
      %s38 = sphi 0, %s37
      %s54 = sphi 0, %s38
      %s58 = sphi 0, %s58
      %s60 = sphi 0, %s58
      %s61 = sphi 0, %s60
      %s75 = sphi 0, %s61
      %s79 = sphi 0, %s79
      %s81 = sphi 0, %s79
      %s82 = sphi 0, %s81
      %s96 = sphi 0, %s82
      %s100 = sphi 0, %s100
      %s102 = sphi 0, %s100
      %s103 = sphi 0, %s102
      %s117 = sphi 0, %s103
      %s121 = sphi 0, %s121
      %s123 = sphi 0, %s121
      %s124 = sphi 0, %s123
      %s138 = sphi 0, %s124
      %s144 = sphi 0, %s146
      %s147 = sphi 0, %s144
      %s148 = sphi 0, %s147
      %s164 = sphi 0, %s148
      %s170 = sphi 0, %s172
      %s173 = sphi 0, %s170
      %s174 = sphi 0, %s173
      %s190 = sphi 0, %s174
      %s196 = sphi 0, %s198
      %s199 = sphi 0, %s196
      %s200 = sphi 0, %s199
      %s216 = sphi 0, %s200
    $region4: #{tpu_custom_call.1} parent=1 // loop_header_branch
      %27 = sbr.rel (%p25) target = $region8
    $region5: #{tpu_custom_call.1} parent=1 // loop_body
      %s29 = ssub.s32 %s24, 1
      %s30 = ssub.s32 %s24, 2
      %s31 = sadd.s32 %s24, 1
      %s32 = ssub.s32 %s24, %s31
      %p33 = scmp.eq.s32.totalorder %s32, 0
      %s35 = sadd.s32 %s34, 1
      %s36 = scalar_select %p33, %s34, %s35
      %p39 = pneg %p33
      %p40 = scmp.eq.s32.totalorder %s24, 1
      %p41 = por %p39, %p40
      %p42 = scmp.ne.s32.totalorder %s34, %s37
      %p43 = scmp.eq.s32.totalorder %s24, 0
      %p44 = por %p42, %p43
      %p45 = scmp.ne.s32.totalorder %s34, %s37
      %p46 = scmp.eq.s32.totalorder %s29, 1
      %p47 = por %p45, %p46
      %p48 = scmp.ne.s32.totalorder %s37, %s38
      %p49 = scmp.eq.s32.totalorder %s29, 0
      %p50 = por %p48, %p49
      %p51 = scmp.ne.s32.totalorder %s37, %s38
      %p52 = scmp.eq.s32.totalorder %s30, 1
      %p53 = por %p51, %p52
      %p55 = scmp.ne.s32.totalorder %s38, %s54
      %p56 = scmp.eq.s32.totalorder %s30, 0
      %p57 = por %p55, %p56
      %s59 = sadd.s32 %s58, 1
      %p62 = scmp.eq.s32.totalorder %s24, 1
      %p63 = scmp.ne.s32.totalorder %s58, %s60
      %p64 = scmp.eq.s32.totalorder %s24, 0
      %p65 = por %p63, %p64
      %p66 = scmp.ne.s32.totalorder %s58, %s60
      %p67 = scmp.eq.s32.totalorder %s29, 1
      %p68 = por %p66, %p67
      %p69 = scmp.ne.s32.totalorder %s60, %s61
      %p70 = scmp.eq.s32.totalorder %s29, 0
      %p71 = por %p69, %p70
      %p72 = scmp.ne.s32.totalorder %s60, %s61
      %p73 = scmp.eq.s32.totalorder %s30, 1
      %p74 = por %p72, %p73
      %p76 = scmp.ne.s32.totalorder %s61, %s75
      %p77 = scmp.eq.s32.totalorder %s30, 0
      %p78 = por %p76, %p77
      %s80 = sadd.s32 %s79, 1
      %p83 = scmp.eq.s32.totalorder %s24, 1
      %p84 = scmp.ne.s32.totalorder %s79, %s81
      %p85 = scmp.eq.s32.totalorder %s24, 0
      %p86 = por %p84, %p85
      %p87 = scmp.ne.s32.totalorder %s79, %s81
      %p88 = scmp.eq.s32.totalorder %s29, 1
      %p89 = por %p87, %p88
      %p90 = scmp.ne.s32.totalorder %s81, %s82
      %p91 = scmp.eq.s32.totalorder %s29, 0
      %p92 = por %p90, %p91
      %p93 = scmp.ne.s32.totalorder %s81, %s82
      %p94 = scmp.eq.s32.totalorder %s30, 1
      %p95 = por %p93, %p94
      %p97 = scmp.ne.s32.totalorder %s82, %s96
      %p98 = scmp.eq.s32.totalorder %s30, 0
      %p99 = por %p97, %p98
      %s101 = sadd.s32 %s100, 1
      %p104 = scmp.eq.s32.totalorder %s24, 1
      %p105 = scmp.ne.s32.totalorder %s100, %s102
      %p106 = scmp.eq.s32.totalorder %s24, 0
      %p107 = por %p105, %p106
      %p108 = scmp.ne.s32.totalorder %s100, %s102
      %p109 = scmp.eq.s32.totalorder %s29, 1
      %p110 = por %p108, %p109
      %p111 = scmp.ne.s32.totalorder %s102, %s103
      %p112 = scmp.eq.s32.totalorder %s29, 0
      %p113 = por %p111, %p112
      %p114 = scmp.ne.s32.totalorder %s102, %s103
      %p115 = scmp.eq.s32.totalorder %s30, 1
      %p116 = por %p114, %p115
      %p118 = scmp.ne.s32.totalorder %s103, %s117
      %p119 = scmp.eq.s32.totalorder %s30, 0
      %p120 = por %p118, %p119
      %s122 = sadd.s32 %s121, 1
      %p125 = scmp.eq.s32.totalorder %s24, 1
      %p126 = scmp.ne.s32.totalorder %s121, %s123
      %p127 = scmp.eq.s32.totalorder %s24, 0
      %p128 = por %p126, %p127
      %p129 = scmp.ne.s32.totalorder %s121, %s123
      %p130 = scmp.eq.s32.totalorder %s29, 1
      %p131 = por %p129, %p130
      %p132 = scmp.ne.s32.totalorder %s123, %s124
      %p133 = scmp.eq.s32.totalorder %s29, 0
      %p134 = por %p132, %p133
      %p135 = scmp.ne.s32.totalorder %s123, %s124
      %p136 = scmp.eq.s32.totalorder %s30, 1
      %p137 = por %p135, %p136
      %p139 = scmp.ne.s32.totalorder %s124, %s138
      %p140 = scmp.eq.s32.totalorder %s30, 0
      %p141 = por %p139, %p140
      %s142 = ssub.s32 %s24, %s31
      %p143 = scmp.eq.s32.totalorder %s142, 0
      %s145 = sadd.s32 %s144, 1
      %s146 = scalar_select %p143, %s144, %s145
      %p149 = pneg %p143
      %p150 = scmp.eq.s32.totalorder %s24, 1
      %p151 = por %p149, %p150
      %p152 = scmp.ne.s32.totalorder %s144, %s147
      %p153 = scmp.eq.s32.totalorder %s24, 0
      %p154 = por %p152, %p153
      %p155 = scmp.ne.s32.totalorder %s144, %s147
      %p156 = scmp.eq.s32.totalorder %s29, 1
      %p157 = por %p155, %p156
      %p158 = scmp.ne.s32.totalorder %s147, %s148
      %p159 = scmp.eq.s32.totalorder %s29, 0
      %p160 = por %p158, %p159
      %p161 = scmp.ne.s32.totalorder %s147, %s148
      %p162 = scmp.eq.s32.totalorder %s30, 1
      %p163 = por %p161, %p162
      %p165 = scmp.ne.s32.totalorder %s148, %s164
      %p166 = scmp.eq.s32.totalorder %s30, 0
      %p167 = por %p165, %p166
      %s168 = ssub.s32 %s24, %s31
      %p169 = scmp.eq.s32.totalorder %s168, 0
      %s171 = sadd.s32 %s170, 1
      %s172 = scalar_select %p169, %s170, %s171
      %p175 = pneg %p169
      %p176 = scmp.eq.s32.totalorder %s24, 1
      %p177 = por %p175, %p176
      %p178 = scmp.ne.s32.totalorder %s170, %s173
      %p179 = scmp.eq.s32.totalorder %s24, 0
      %p180 = por %p178, %p179
      %p181 = scmp.ne.s32.totalorder %s170, %s173
      %p182 = scmp.eq.s32.totalorder %s29, 1
      %p183 = por %p181, %p182
      %p184 = scmp.ne.s32.totalorder %s173, %s174
      %p185 = scmp.eq.s32.totalorder %s29, 0
      %p186 = por %p184, %p185
      %p187 = scmp.ne.s32.totalorder %s173, %s174
      %p188 = scmp.eq.s32.totalorder %s30, 1
      %p189 = por %p187, %p188
      %p191 = scmp.ne.s32.totalorder %s174, %s190
      %p192 = scmp.eq.s32.totalorder %s30, 0
      %p193 = por %p191, %p192
      %s194 = ssub.s32 %s24, %s31
      %p195 = scmp.eq.s32.totalorder %s194, 0
      %s197 = sadd.s32 %s196, 1
      %s198 = scalar_select %p195, %s196, %s197
      %p201 = pneg %p195
      %p202 = scmp.eq.s32.totalorder %s24, 1
      %p203 = por %p201, %p202
      %p204 = scmp.ne.s32.totalorder %s196, %s199
      %p205 = scmp.eq.s32.totalorder %s24, 0
      %p206 = por %p204, %p205
      %p207 = scmp.ne.s32.totalorder %s196, %s199
      %p208 = scmp.eq.s32.totalorder %s29, 1
      %p209 = por %p207, %p208
      %p210 = scmp.ne.s32.totalorder %s199, %s200
      %p211 = scmp.eq.s32.totalorder %s29, 0
      %p212 = por %p210, %p211
      %p213 = scmp.ne.s32.totalorder %s199, %s200
      %p214 = scmp.eq.s32.totalorder %s30, 1
      %p215 = por %p213, %p214
      %p217 = scmp.ne.s32.totalorder %s200, %s216
      %p218 = scmp.eq.s32.totalorder %s30, 0
      %p219 = por %p217, %p218
      %p220 = scmp.le.s32.totalorder 1, %s24
      %p221 = scmp.lt.s32.totalorder %s24, 3
      %p222 = pnand %p220, %p221
      %p223 = pneg %p222
      // Predicated region
      $region9: #{tpu_custom_call.1} parent=5 // pred_check
        _
      $region10: #{tpu_custom_call.1} parent=5 // pred_check_branch
        %225 = sbr.rel (%p222) target = $region12
      $region11: #{tpu_custom_call.1} parent=5 // pred_region
        %s226 = ssub.s32 %s24, 1
        // Predicated region
        $region13: #{tpu_custom_call.1} parent=11 // pred_check
          %p227 = pneg %p71
        $region14: #{tpu_custom_call.1} parent=11 // pred_check_branch
          %229 = sbr.rel (%p227) target = $region16
        $region15: #{tpu_custom_call.1} parent=11 // pred_region
          _
        $region16: #{tpu_custom_call.1} parent=11 // pred_fallthru
          _
        // Predicated region
        $region17: #{tpu_custom_call.1} parent=11 // pred_check
          %p230 = pneg %p92
        $region18: #{tpu_custom_call.1} parent=11 // pred_check_branch
          %232 = sbr.rel (%p230) target = $region20
        $region19: #{tpu_custom_call.1} parent=11 // pred_region
          _
        $region20: #{tpu_custom_call.1} parent=11 // pred_fallthru
          _
        // Predicated region
        $region21: #{tpu_custom_call.1} parent=11 // pred_check
          %p233 = pneg %p113
        $region22: #{tpu_custom_call.1} parent=11 // pred_check_branch
          %235 = sbr.rel (%p233) target = $region24
        $region23: #{tpu_custom_call.1} parent=11 // pred_region
          %s237 = ssub.s32 13056, 13056
          %238 = vsyncadd [#allocation6], %s237
          %s239 = sshll.u32 [#allocation5], 4
          %s240 = int_to_ptr.vmem [resolvable:$true] %s239
          %245 = dma.hbm_to_vmem [thread:$0]  %s3, 13056, %s240, [#allocation6], 256, 256, 16
        $region24: #{tpu_custom_call.1} parent=11 // pred_fallthru
          _
        // Predicated region
        $region25: #{tpu_custom_call.1} parent=11 // pred_check
          %p246 = pneg %p134
        $region26: #{tpu_custom_call.1} parent=11 // pred_check_branch
          %248 = sbr.rel (%p246) target = $region28
        $region27: #{tpu_custom_call.1} parent=11 // pred_region
          _
        $region28: #{tpu_custom_call.1} parent=11 // pred_fallthru
          _
      $region12: #{tpu_custom_call.1} parent=5 // pred_fallthru
        _
      %p249 = scmp.lt.s32.totalorder %s24, 2
      // Predicated region
      $region29: #{tpu_custom_call.1} parent=5 // pred_check
        %p250 = pneg %p249
      $region30: #{tpu_custom_call.1} parent=5 // pred_check_branch
        %252 = sbr.rel (%p250) target = $region32
      $region31: #{tpu_custom_call.1} parent=5 // pred_region
        // Predicated region
        $region33: #{tpu_custom_call.1} parent=31 // pred_check
          %p253 = pneg %p44
        $region34: #{tpu_custom_call.1} parent=31 // pred_check_branch
          %255 = sbr.rel (%p253) target = $region36
        $region35: #{tpu_custom_call.1} parent=31 // pred_region
          %s256 = sand.u32 %s34, 1
          %s257 = scalar_lea.sflag [#allocation3], %s256
          %s258 = sand.u32 %s34, 1
          %s259 = smul.addr %s258, 16
          %s260 = scalar_lea.vmem [#allocation2], %s259
          %s262 = ssub.s32 256, 256
          %263 = vsyncadd %s257, %s262
          %s264 = smul.addr %s24, 2
          %s265 = smul.addr %s264, 128
          %s266 = scalar_lea.hbm %s0, %s265
          %s267 = sshll.u32 %s260, 4
          %s268 = int_to_ptr.vmem [resolvable:$true] %s267
          %273 = dma.hbm_to_vmem [thread:$0]  %s266, 256, %s268, %s257, 128, 128, 8
        $region36: #{tpu_custom_call.1} parent=31 // pred_fallthru
          _
      $region32: #{tpu_custom_call.1} parent=5 // pred_fallthru
        _
      %p274 = scmp.le.s32.totalorder 1, %s24
      %p275 = scmp.lt.s32.totalorder %s24, 3
      %p276 = pnand %p274, %p275
      %p277 = pneg %p276
      // Predicated region
      $region37: #{tpu_custom_call.1} parent=5 // pred_check
        _
      $region38: #{tpu_custom_call.1} parent=5 // pred_check_branch
        %279 = sbr.rel (%p276) target = $region40
      $region39: #{tpu_custom_call.1} parent=5 // pred_region
        %s280 = ssub.s32 %s24, 1
        %s281 = sand.u32 %s37, 1
        %s282 = scalar_lea.sflag [#allocation3], %s281
        %s283 = sand.u32 %s37, 1
        %s284 = smul.addr %s283, 16
        %s285 = scalar_lea.vmem [#allocation2], %s284
        // Predicated region
        $region41: #{tpu_custom_call.1} parent=39 // pred_check
          %p286 = pneg %p50
        $region42: #{tpu_custom_call.1} parent=39 // pred_check_branch
          %288 = sbr.rel (%p286) target = $region44
        $region43: #{tpu_custom_call.1} parent=39 // pred_region
          %289 = dma.done %s282, 256
        $region44: #{tpu_custom_call.1} parent=39 // pred_fallthru
          _
        // Predicated region
        $region45: #{tpu_custom_call.1} parent=39 // pred_check
          %p290 = pneg %p113
        $region46: #{tpu_custom_call.1} parent=39 // pred_check_branch
          %292 = sbr.rel (%p290) target = $region48
        $region47: #{tpu_custom_call.1} parent=39 // pred_region
          %293 = dma.done [#allocation6], 13056
        $region48: #{tpu_custom_call.1} parent=39 // pred_fallthru
          _
        %s294 = sand.u32 %s37, 1
        %s295 = scalar_lea.sflag [#allocation3], %s294
        %s296 = sand.u32 %s37, 1
        %s297 = smul.addr %s296, 16
        %s298 = scalar_lea.vmem [#allocation2], %s297
        %p299 = pneg %p50
        %p300 = pneg %p47
        %p301 = pneg %p71
        %p302 = pneg %p68
        %p303 = pneg %p92
        %p304 = pneg %p89
        %p305 = pneg %p113
        %p306 = pneg %p110
        %p307 = pneg %p134
        %p308 = pneg %p131
        %p309 = pneg %p160
        %p310 = pneg %p157
        %s311 = sand.u32 %s147, 1
        %s312 = scalar_lea.sflag [#allocation4], %s311
        %s313 = sand.u32 %s147, 1
        %s314 = smul.addr %s313, 64
        %s315 = scalar_lea.vmem [#allocation7], %s314
        %p316 = pneg %p186
        %p317 = pneg %p183
        %s318 = sand.u32 %s29, 1
        %s319 = scalar_lea.sflag [#allocation9], %s318
        %s320 = sand.u32 %s173, 1
        %s321 = smul.addr %s320, 2
        %s322 = scalar_lea.vmem [#allocation8], %s321
        %p323 = pneg %p212
        %p324 = pneg %p209
        %s325 = sand.u32 %s29, 1
        %s326 = scalar_lea.sflag [#allocation9], %s325
        %s327 = sand.u32 %s199, 1
        %s328 = smul.addr %s327, 2
        %s329 = scalar_lea.vmem [#allocation10], %s328
        %v330 = vld [vmem:[%s285] sm:$0xff]
        %v331 = vld [vmem:[%s285 + $0x8] sm:$0xff]
        %v332 = vld [vmem:[%s1] sm:$0xff]
        %v333 = vld [vmem:[%s1 + $0x8] sm:$0xff]
        %v334 = vld [vmem:[%s1 + $0x10] sm:$0xff]
        %v335 = vld [vmem:[%s1 + $0x18] sm:$0xff]
        %v336 = vld [vmem:[%s1 + $0x20] sm:$0xff]
        %v337 = vld [vmem:[%s1 + $0x28] sm:$0xff]
        %v338 = vld [vmem:[%s1 + $0x30] sm:$0xff]
        %v339 = vld [vmem:[%s1 + $0x38] sm:$0xff]
        %v340 = vld [vmem:[%s1 + $0x40] sm:$0xff]
        %v341 = vld [vmem:[%s1 + $0x48] sm:$0xff]
        %v342 = vld [vmem:[%s1 + $0x50] sm:$0xff]
        %v343 = vld [vmem:[%s1 + $0x58] sm:$0xff]
        %v344 = vld [vmem:[%s1 + $0x60] sm:$0xff]
        %v345 = vld [vmem:[%s1 + $0x68] sm:$0xff]
        %v346 = vld [vmem:[%s1 + $0x70] sm:$0xff]
        %v347 = vld [vmem:[%s1 + $0x78] sm:$0xff]
        %vm348 = vcmask 523264
        %v350 = vsel %vm348, %v330, 0
        %v353 = vsel %vm348, %v331, 0
        %355 = vmatprep.subr.mxu0 %v333
        %356 = vmatpush1.msra.mxu0 %v332
        %357 = vmatprep.subr.mxu0 %v335
        %358 = vmatpush1.msra.mxu0 %v334
        %359 = vmatprep.subr.mxu0 %v337
        %360 = vmatpush1.msra.mxu0 %v336
        %361 = vmatprep.subr.mxu0 %v339
        %362 = vmatpush1.msra.mxu0 %v338
        %363 = vmatprep.subr.mxu0 %v341
        %364 = vmatpush1.msra.mxu0 %v340
        %365 = vmatprep.subr.mxu0 %v343
        %366 = vmatpush1.msra.mxu0 %v342
        %367 = vmatprep.subr.mxu0 %v345
        %368 = vmatpush1.msra.mxu0 %v344
        %369 = vmatprep.subr.mxu0 %v347
        %370 = vmatpush1.msra.mxu0 %v346
        %371 = vmatprep.subr.mxu0 0.0
        %372 = vmatpush1.msra.mxu0 0.0
        %373 = vmatprep.subr.mxu0 0.0
        %374 = vmatpush1.msra.mxu0 0.0
        %375 = vmatprep.subr.mxu0 0.0
        %376 = vmatpush1.msra.mxu0 0.0
        %377 = vmatprep.subr.mxu0 0.0
        %378 = vmatpush1.msra.mxu0 0.0
        %379 = vmatprep.subr.mxu0 0.0
        %380 = vmatpush1.msra.mxu0 0.0
        %381 = vmatprep.subr.mxu0 0.0
        %382 = vmatpush1.msra.mxu0 0.0
        %383 = vmatprep.subr.mxu0 0.0
        %384 = vmatpush1.msra.mxu0 0.0
        %385 = vmatprep.subr.mxu0 0.0
        %386 = vmatpush1.msra.mxu0 0.0
        %387 = vmatprep.subr.mxu0 0.0
        %388 = vmatpush1.msra.mxu0 0.0
        %389 = vmatprep.subr.mxu0 0.0
        %390 = vmatpush1.msra.mxu0 0.0
        %391 = vmatprep.subr.mxu0 0.0
        %392 = vmatpush1.msra.mxu0 0.0
        %393 = vmatprep.subr.mxu0 0.0
        %394 = vmatpush1.msra.mxu0 0.0
        %395 = vmatprep.subr.mxu0 0.0
        %396 = vmatpush1.msra.mxu0 0.0
        %397 = vmatprep.subr.mxu0 0.0
        %398 = vmatpush1.msra.mxu0 0.0
        %399 = vmatprep.subr.mxu0 0.0
        %400 = vmatpush1.msra.mxu0 0.0
        %401 = vmatprep.subr.mxu0 0.0
        %402 = vmatpush1.msra.mxu0 0.0
        %403 = vmatprep.subr.mxu0 0.0
        %404 = vmatpush1.msra.mxu0 0.0
        %405 = vmatprep.subr.mxu0 0.0
        %406 = vmatpush1.msra.mxu0 0.0
        %407 = vmatprep.subr.mxu0 0.0
        %408 = vmatpush1.msra.mxu0 0.0
        %409 = vmatprep.subr.mxu0 0.0
        %410 = vmatpush1.msra.mxu0 0.0
        %411 = vmatprep.subr.mxu0 0.0
        %412 = vmatpush1.msra.mxu0 0.0
        %413 = vmatprep.subr.mxu0 0.0
        %414 = vmatpush1.msra.mxu0 0.0
        %415 = vmatprep.subr.mxu0 0.0
        %416 = vmatpush1.msra.mxu0 0.0
        %417 = vmatprep.subr.mxu0 0.0
        %418 = vmatpush1.msra.mxu0 0.0
        %419 = vmatprep.mubr.f32.mxu0 0.0
        %420 = vmatmul.mubr.f32.gmra.mrb[0].mxu0 %v350
        %v421 = vpop.f32.mrb[0].mxu0
        %v422 = vadd.f32 0.0, %v421
        %v423 = vpop.f32.mrb[0].mxu0
        %v424 = vadd.f32 0.0, %v423
        %425 = vmatprep.mubr.f32.mxu0 0.0
        %426 = vmatmul.mubr.f32.gmra.mrb[0].mxu0 %v353
        %v427 = vpop.f32.mrb[0].mxu0
        %v428 = vadd.f32 0.0, %v427
        %v429 = vpop.f32.mrb[0].mxu0
        %v430 = vadd.f32 0.0, %v429
        %431 = vdwg.mxu0
        %v432 = vld [vmem:[#allocation5] sm:$0xff]
        %v433 = vld [vmem:[#allocation5 + $0x8] sm:$0xff]
        %v434 = vld [vmem:[#allocation5 + $0x10] sm:$0xff]
        %v435 = vld [vmem:[#allocation5 + $0x18] sm:$0xff]
        %v436 = vld [vmem:[#allocation5 + $0x20] sm:$0xff]
        %v437 = vld [vmem:[#allocation5 + $0x28] sm:$0xff]
        %v438 = vld [vmem:[#allocation5 + $0x30] sm:$0xff]
        %v439 = vld [vmem:[#allocation5 + $0x38] sm:$0xff]
        %v440 = vld [vmem:[#allocation5 + $0x40] sm:$0xff]
        %v441 = vld [vmem:[#allocation5 + $0x48] sm:$0xff]
        %v442 = vld [vmem:[#allocation5 + $0x50] sm:$0xff]
        %v443 = vld [vmem:[#allocation5 + $0x58] sm:$0xff]
        %v444 = vld [vmem:[#allocation5 + $0x60] sm:$0xff]
        %v445 = vld [vmem:[#allocation5 + $0x68] sm:$0xff]
        %v446 = vld [vmem:[#allocation5 + $0x70] sm:$0xff]
        %v447 = vld [vmem:[#allocation5 + $0x78] sm:$0xff]
        %v448 = vld [vmem:[#allocation5 + $0x80] sm:$0xff]
        %v449 = vld [vmem:[#allocation5 + $0x88] sm:$0xff]
        %v450 = vld [vmem:[#allocation5 + $0x90] sm:$0xff]
        %v451 = vld [vmem:[#allocation5 + $0x98] sm:$0xff]
        %v452 = vld [vmem:[#allocation5 + $0xa0] sm:$0xff]
        %v453 = vld [vmem:[#allocation5 + $0xa8] sm:$0xff]
        %v454 = vld [vmem:[#allocation5 + $0xb0] sm:$0xff]
        %v455 = vld [vmem:[#allocation5 + $0xb8] sm:$0xff]
        %v456 = vld [vmem:[#allocation5 + $0xc0] sm:$0xff]
        %v457 = vld [vmem:[#allocation5 + $0xc8] sm:$0xff]
        %v458 = vld [vmem:[#allocation5 + $0xd0] sm:$0xff]
        %v459 = vld [vmem:[#allocation5 + $0xd8] sm:$0xff]
        %v460 = vld [vmem:[#allocation5 + $0xe0] sm:$0xff]
        %v461 = vld [vmem:[#allocation5 + $0xe8] sm:$0xff]
        %v462 = vld [vmem:[#allocation5 + $0xf0] sm:$0xff]
        %v463 = vld [vmem:[#allocation5 + $0xf8] sm:$0xff]
        %v464 = vld [vmem:[#allocation5 + $0x100] sm:$0xff]
        %v465 = vld [vmem:[#allocation5 + $0x108] sm:$0xff]
        %vm466 = vcmask 64512
        %v468 = vsel %vm466, %v424, 0
        %v471 = vsel %vm466, %v430, 0
        %473 = vmatprep.subr.mxu0 %v433
        %474 = vmatpush1.msra.mxu0 %v432
        %475 = vmatprep.subr.mxu0 %v435
        %476 = vmatpush1.msra.mxu0 %v434
        %477 = vmatprep.subr.mxu0 %v437
        %478 = vmatpush1.msra.mxu0 %v436
        %479 = vmatprep.subr.mxu0 %v439
        %480 = vmatpush1.msra.mxu0 %v438
        %481 = vmatprep.subr.mxu0 %v441
        %482 = vmatpush1.msra.mxu0 %v440
        %483 = vmatprep.subr.mxu0 %v443
        %484 = vmatpush1.msra.mxu0 %v442
        %485 = vmatprep.subr.mxu0 %v445
        %486 = vmatpush1.msra.mxu0 %v444
        %487 = vmatprep.subr.mxu0 %v447
        %488 = vmatpush1.msra.mxu0 %v446
        %489 = vmatprep.subr.mxu0 %v449
        %490 = vmatpush1.msra.mxu0 %v448
        %491 = vmatprep.subr.mxu0 %v451
        %492 = vmatpush1.msra.mxu0 %v450
        %493 = vmatprep.subr.mxu0 %v453
        %494 = vmatpush1.msra.mxu0 %v452
        %495 = vmatprep.subr.mxu0 %v455
        %496 = vmatpush1.msra.mxu0 %v454
        %497 = vmatprep.subr.mxu0 %v457
        %498 = vmatpush1.msra.mxu0 %v456
        %499 = vmatprep.subr.mxu0 %v459
        %500 = vmatpush1.msra.mxu0 %v458
        %501 = vmatprep.subr.mxu0 %v461
        %502 = vmatpush1.msra.mxu0 %v460
        %503 = vmatprep.subr.mxu0 %v463
        %504 = vmatpush1.msra.mxu0 %v462
        %505 = vmatprep.subr.mxu0 %v465
        %506 = vmatpush1.msra.mxu0 %v464
        %507 = vmatprep.subr.mxu0 0.0
        %508 = vmatpush1.msra.mxu0 0.0
        %509 = vmatprep.subr.mxu0 0.0
        %510 = vmatpush1.msra.mxu0 0.0
        %511 = vmatprep.subr.mxu0 0.0
        %512 = vmatpush1.msra.mxu0 0.0
        %513 = vmatprep.subr.mxu0 0.0
        %514 = vmatpush1.msra.mxu0 0.0
        %515 = vmatprep.subr.mxu0 0.0
        %516 = vmatpush1.msra.mxu0 0.0
        %517 = vmatprep.subr.mxu0 0.0
        %518 = vmatpush1.msra.mxu0 0.0
        %519 = vmatprep.subr.mxu0 0.0
        %520 = vmatpush1.msra.mxu0 0.0
        %521 = vmatprep.subr.mxu0 0.0
        %522 = vmatpush1.msra.mxu0 0.0
        %523 = vmatprep.subr.mxu0 0.0
        %524 = vmatpush1.msra.mxu0 0.0
        %525 = vmatprep.subr.mxu0 0.0
        %526 = vmatpush1.msra.mxu0 0.0
        %527 = vmatprep.subr.mxu0 0.0
        %528 = vmatpush1.msra.mxu0 0.0
        %529 = vmatprep.subr.mxu0 0.0
        %530 = vmatpush1.msra.mxu0 0.0
        %531 = vmatprep.subr.mxu0 0.0
        %532 = vmatpush1.msra.mxu0 0.0
        %533 = vmatprep.subr.mxu0 0.0
        %534 = vmatpush1.msra.mxu0 0.0
        %535 = vmatprep.subr.mxu0 0.0
        %536 = vmatpush1.msra.mxu0 0.0
        %537 = vmatprep.mubr.f32.mxu0 %v468
        %538 = vmatmul.mubr.f32.gmra.mrb[0].mxu0 %v422
        %v539 = vpop.f32.mrb[0].mxu0
        %v540 = vadd.f32 0.0, %v539
        %v541 = vpop.f32.mrb[0].mxu0
        %v542 = vadd.f32 0.0, %v541
        %543 = vmatprep.mubr.f32.mxu0 %v471
        %544 = vmatmul.mubr.f32.gmra.mrb[0].mxu0 %v428
        %v545 = vpop.f32.mrb[0].mxu0
        %v546 = vadd.f32 0.0, %v545
        %v547 = vpop.f32.mrb[0].mxu0
        %v548 = vadd.f32 0.0, %v547
        %549 = vdwg.mxu0
        %v550 = vld [vmem:[%s2] sm:$0xff]
        %v551 = vld [vmem:[%s2 + $0x8] sm:$0xff]
        %v552 = vld [vmem:[%s2 + $0x10] sm:$0xff]
        %v553 = vld [vmem:[%s2 + $0x18] sm:$0xff]
        %s554 = scalar_lea.vmem [#allocation5], 272
        %v555 = vld [vmem:[%s554] sm:$0xff]
        %v556 = vld [vmem:[%s554 + $0x8] sm:$0xff]
        %v557 = vld [vmem:[%s554 + $0x10] sm:$0xff]
        %v558 = vld [vmem:[%s554 + $0x18] sm:$0xff]
        %v559 = vld [vmem:[%s554 + $0x20] sm:$0xff]
        %v560 = vld [vmem:[%s554 + $0x28] sm:$0xff]
        %v561 = vld [vmem:[%s554 + $0x30] sm:$0xff]
        %v562 = vld [vmem:[%s554 + $0x38] sm:$0xff]
        %v563 = vld [vmem:[%s554 + $0x40] sm:$0xff]
        %v564 = vld [vmem:[%s554 + $0x48] sm:$0xff]
        %v565 = vld [vmem:[%s554 + $0x50] sm:$0xff]
        %v566 = vld [vmem:[%s554 + $0x58] sm:$0xff]
        %v567 = vld [vmem:[%s554 + $0x60] sm:$0xff]
        %v568 = vld [vmem:[%s554 + $0x68] sm:$0xff]
        %v569 = vld [vmem:[%s554 + $0x70] sm:$0xff]
        %v570 = vld [vmem:[%s554 + $0x78] sm:$0xff]
        %v571 = vld [vmem:[%s554 + $0x80] sm:$0xff]
        %v572 = vld [vmem:[%s554 + $0x88] sm:$0xff]
        %v573 = vld [vmem:[%s554 + $0x90] sm:$0xff]
        %v574 = vld [vmem:[%s554 + $0x98] sm:$0xff]
        %v575 = vld [vmem:[%s554 + $0xa0] sm:$0xff]
        %v576 = vld [vmem:[%s554 + $0xa8] sm:$0xff]
        %v577 = vld [vmem:[%s554 + $0xb0] sm:$0xff]
        %v578 = vld [vmem:[%s554 + $0xb8] sm:$0xff]
        %v579 = vld [vmem:[%s554 + $0xc0] sm:$0xff]
        %v580 = vld [vmem:[%s554 + $0xc8] sm:$0xff]
        %v581 = vld [vmem:[%s554 + $0xd0] sm:$0xff]
        %v582 = vld [vmem:[%s554 + $0xd8] sm:$0xff]
        %v583 = vld [vmem:[%s554 + $0xe0] sm:$0xff]
        %v584 = vld [vmem:[%s554 + $0xe8] sm:$0xff]
        %v585 = vld [vmem:[%s554 + $0xf0] sm:$0xff]
        %v586 = vld [vmem:[%s554 + $0xf8] sm:$0xff]
        %v587 = vld [vmem:[%s554 + $0x100] sm:$0xff]
        %v588 = vld [vmem:[%s554 + $0x108] sm:$0xff]
        %589 = vmatprep.subr.mxu0 %v556
        %590 = vmatpush1.msra.mxu0 %v555
        %591 = vmatprep.subr.mxu0 %v558
        %592 = vmatpush1.msra.mxu0 %v557
        %593 = vmatprep.subr.mxu0 %v560
        %594 = vmatpush1.msra.mxu0 %v559
        %595 = vmatprep.subr.mxu0 %v562
        %596 = vmatpush1.msra.mxu0 %v561
        %597 = vmatprep.subr.mxu0 %v564
        %598 = vmatpush1.msra.mxu0 %v563
        %599 = vmatprep.subr.mxu0 %v566
        %600 = vmatpush1.msra.mxu0 %v565
        %601 = vmatprep.subr.mxu0 %v568
        %602 = vmatpush1.msra.mxu0 %v567
        %603 = vmatprep.subr.mxu0 %v570
        %604 = vmatpush1.msra.mxu0 %v569
        %605 = vmatprep.subr.mxu0 %v572
        %606 = vmatpush1.msra.mxu0 %v571
        %607 = vmatprep.subr.mxu0 %v574
        %608 = vmatpush1.msra.mxu0 %v573
        %609 = vmatprep.subr.mxu0 %v576
        %610 = vmatpush1.msra.mxu0 %v575
        %611 = vmatprep.subr.mxu0 %v578
        %612 = vmatpush1.msra.mxu0 %v577
        %613 = vmatprep.subr.mxu0 %v580
        %614 = vmatpush1.msra.mxu0 %v579
        %615 = vmatprep.subr.mxu0 %v582
        %616 = vmatpush1.msra.mxu0 %v581
        %617 = vmatprep.subr.mxu0 %v584
        %618 = vmatpush1.msra.mxu0 %v583
        %619 = vmatprep.subr.mxu0 %v586
        %620 = vmatpush1.msra.mxu0 %v585
        %621 = vmatprep.subr.mxu0 %v588
        %622 = vmatpush1.msra.mxu0 %v587
        %623 = vmatprep.subr.mxu0 0.0
        %624 = vmatpush1.msra.mxu0 0.0
        %625 = vmatprep.subr.mxu0 0.0
        %626 = vmatpush1.msra.mxu0 0.0
        %627 = vmatprep.subr.mxu0 0.0
        %628 = vmatpush1.msra.mxu0 0.0
        %629 = vmatprep.subr.mxu0 0.0
        %630 = vmatpush1.msra.mxu0 0.0
        %631 = vmatprep.subr.mxu0 0.0
        %632 = vmatpush1.msra.mxu0 0.0
        %633 = vmatprep.subr.mxu0 0.0
        %634 = vmatpush1.msra.mxu0 0.0
        %635 = vmatprep.subr.mxu0 0.0
        %636 = vmatpush1.msra.mxu0 0.0
        %637 = vmatprep.subr.mxu0 0.0
        %638 = vmatpush1.msra.mxu0 0.0
        %639 = vmatprep.subr.mxu0 0.0
        %640 = vmatpush1.msra.mxu0 0.0
        %641 = vmatprep.subr.mxu0 0.0
        %642 = vmatpush1.msra.mxu0 0.0
        %643 = vmatprep.subr.mxu0 0.0
        %644 = vmatpush1.msra.mxu0 0.0
        %645 = vmatprep.subr.mxu0 0.0
        %646 = vmatpush1.msra.mxu0 0.0
        %647 = vmatprep.subr.mxu0 0.0
        %648 = vmatpush1.msra.mxu0 0.0
        %649 = vmatprep.subr.mxu0 0.0
        %650 = vmatpush1.msra.mxu0 0.0
        %651 = vmatprep.subr.mxu0 0.0
        %652 = vmatpush1.msra.mxu0 0.0
        %653 = vmatprep.mubr.f32.mxu0 %v468
        %654 = vmatmul.mubr.f32.gmra.mrb[0].mxu0 %v422
        %v655 = vpop.f32.mrb[0].mxu0
        %v656 = vadd.f32 0.0, %v655
        %v657 = vpop.f32.mrb[0].mxu0
        %v658 = vadd.f32 0.0, %v657
        %659 = vmatprep.mubr.f32.mxu0 %v471
        %660 = vmatmul.mubr.f32.gmra.mrb[0].mxu0 %v428
        %v661 = vpop.f32.mrb[0].mxu0
        %v662 = vadd.f32 0.0, %v661
        %v663 = vpop.f32.mrb[0].mxu0
        %v664 = vadd.f32 0.0, %v663
        %665 = vdwg.mxu0
        %s666 = scalar_lea.vmem %s2, 32
        %v667 = vld [vmem:[%s666] sm:$0xff]
        %v668 = vld [vmem:[%s666 + $0x8] sm:$0xff]
        %v669 = vld [vmem:[%s666 + $0x10] sm:$0xff]
        %v670 = vld [vmem:[%s666 + $0x18] sm:$0xff]
        %vm671 = vcmask 130048
        %v673 = vsel %vm671, %v667, 0
        %v676 = vsel %vm671, %v668, 0
        %v679 = vsel %vm671, %v669, 0
        %v682 = vsel %vm671, %v670, 0
        %684 = vmatprep.subr.mxu0 %v658
        %685 = vmatpush1.msra.mxu0 %v656
        %686 = vmatprep.subr.mxu0 %v664
        %687 = vmatpush1.msra.mxu0 %v662
        %688 = vmatprep.subr.mxu0 0.0
        %689 = vmatpush1.msra.mxu0 0.0
        %690 = vmatprep.subr.mxu0 0.0
        %691 = vmatpush1.msra.mxu0 0.0
        %692 = vmatprep.subr.mxu0 0.0
        %693 = vmatpush1.msra.mxu0 0.0
        %694 = vmatprep.subr.mxu0 0.0
        %695 = vmatpush1.msra.mxu0 0.0
        %696 = vmatprep.subr.mxu0 0.0
        %697 = vmatpush1.msra.mxu0 0.0
        %698 = vmatprep.subr.mxu0 0.0
        %699 = vmatpush1.msra.mxu0 0.0
        %700 = vmatprep.subr.mxu0 0.0
        %701 = vmatpush1.msra.mxu0 0.0
        %702 = vmatprep.subr.mxu0 0.0
        %703 = vmatpush1.msra.mxu0 0.0
        %704 = vmatprep.subr.mxu0 0.0
        %705 = vmatpush1.msra.mxu0 0.0
        %706 = vmatprep.subr.mxu0 0.0
        %707 = vmatpush1.msra.mxu0 0.0
        %708 = vmatprep.subr.mxu0 0.0
        %709 = vmatpush1.msra.mxu0 0.0
        %710 = vmatprep.subr.mxu0 0.0
        %711 = vmatpush1.msra.mxu0 0.0
        %712 = vmatprep.subr.mxu0 0.0
        %713 = vmatpush1.msra.mxu0 0.0
        %714 = vmatprep.subr.mxu0 0.0
        %715 = vmatpush1.msra.mxu0 0.0
        %716 = vmatprep.subr.mxu0 0.0
        %717 = vmatpush1.msra.mxu0 0.0
        %718 = vmatprep.subr.mxu0 0.0
        %719 = vmatpush1.msra.mxu0 0.0
        %720 = vmatprep.subr.mxu0 0.0
        %721 = vmatpush1.msra.mxu0 0.0
        %722 = vmatprep.subr.mxu0 0.0
        %723 = vmatpush1.msra.mxu0 0.0
        %724 = vmatprep.subr.mxu0 0.0
        %725 = vmatpush1.msra.mxu0 0.0
        %726 = vmatprep.subr.mxu0 0.0
        %727 = vmatpush1.msra.mxu0 0.0
        %728 = vmatprep.subr.mxu0 0.0
        %729 = vmatpush1.msra.mxu0 0.0
        %730 = vmatprep.subr.mxu0 0.0
        %731 = vmatpush1.msra.mxu0 0.0
        %732 = vmatprep.subr.mxu0 0.0
        %733 = vmatpush1.msra.mxu0 0.0
        %734 = vmatprep.subr.mxu0 0.0
        %735 = vmatpush1.msra.mxu0 0.0
        %736 = vmatprep.subr.mxu0 0.0
        %737 = vmatpush1.msra.mxu0 0.0
        %738 = vmatprep.subr.mxu0 0.0
        %739 = vmatpush1.msra.mxu0 0.0
        %740 = vmatprep.subr.mxu0 0.0
        %741 = vmatpush1.msra.mxu0 0.0
        %742 = vmatprep.subr.mxu0 0.0
        %743 = vmatpush1.msra.mxu0 0.0
        %744 = vmatprep.subr.mxu0 0.0
        %745 = vmatpush1.msra.mxu0 0.0
        %746 = vmatprep.subr.mxu0 0.0
        %747 = vmatpush1.msra.mxu0 0.0
        %748 = vmatprep.mubr.f32.mxu0 0.0
        %749 = vmatmul.mubr.f32.gmra.mrb[0].mxu0 %v673
        %v750 = vpop.f32.mrb[0].mxu0
        %v751 = vadd.f32 0.0, %v750
        %v752 = vpop.f32.mrb[0].mxu0
        %v753 = vadd.f32 0.0, %v752
        %754 = vmatprep.mubr.f32.mxu0 0.0
        %755 = vmatmul.mubr.f32.gmra.mrb[0].mxu0 %v676
        %v756 = vpop.f32.mrb[0].mxu0
        %v757 = vadd.f32 0.0, %v756
        %v758 = vpop.f32.mrb[0].mxu0
        %v759 = vadd.f32 0.0, %v758
        %760 = vmatprep.mubr.f32.mxu0 0.0
        %761 = vmatmul.mubr.f32.gmra.mrb[0].mxu0 %v679
        %v762 = vpop.f32.mrb[0].mxu0
        %v763 = vadd.f32 0.0, %v762
        %v764 = vpop.f32.mrb[0].mxu0
        %v765 = vadd.f32 0.0, %v764
        %766 = vmatprep.mubr.f32.mxu0 0.0
        %767 = vmatmul.mubr.f32.gmra.mrb[0].mxu0 %v682
        %v768 = vpop.f32.mrb[0].mxu0
        %v769 = vadd.f32 0.0, %v768
        %v770 = vpop.f32.mrb[0].mxu0
        %v771 = vadd.f32 0.0, %v770
        %772 = vdwg.mxu0
        %v774 = vsel %vm671, %v550, 0
        %v777 = vsel %vm671, %v551, 0
        %v780 = vsel %vm671, %v552, 0
        %v783 = vsel %vm671, %v553, 0
        %785 = vmatprep.subr.mxu0 %v542
        %786 = vmatpush1.msra.mxu0 %v540
        %787 = vmatprep.subr.mxu0 %v548
        %788 = vmatpush1.msra.mxu0 %v546
        %789 = vmatprep.subr.mxu0 0.0
        %790 = vmatpush1.msra.mxu0 0.0
        %791 = vmatprep.subr.mxu0 0.0
        %792 = vmatpush1.msra.mxu0 0.0
        %793 = vmatprep.subr.mxu0 0.0
        %794 = vmatpush1.msra.mxu0 0.0
        %795 = vmatprep.subr.mxu0 0.0
        %796 = vmatpush1.msra.mxu0 0.0
        %797 = vmatprep.subr.mxu0 0.0
        %798 = vmatpush1.msra.mxu0 0.0
        %799 = vmatprep.subr.mxu0 0.0
        %800 = vmatpush1.msra.mxu0 0.0
        %801 = vmatprep.subr.mxu0 0.0
        %802 = vmatpush1.msra.mxu0 0.0
        %803 = vmatprep.subr.mxu0 0.0
        %804 = vmatpush1.msra.mxu0 0.0
        %805 = vmatprep.subr.mxu0 0.0
        %806 = vmatpush1.msra.mxu0 0.0
        %807 = vmatprep.subr.mxu0 0.0
        %808 = vmatpush1.msra.mxu0 0.0
        %809 = vmatprep.subr.mxu0 0.0
        %810 = vmatpush1.msra.mxu0 0.0
        %811 = vmatprep.subr.mxu0 0.0
        %812 = vmatpush1.msra.mxu0 0.0
        %813 = vmatprep.subr.mxu0 0.0
        %814 = vmatpush1.msra.mxu0 0.0
        %815 = vmatprep.subr.mxu0 0.0
        %816 = vmatpush1.msra.mxu0 0.0
        %817 = vmatprep.subr.mxu0 0.0
        %818 = vmatpush1.msra.mxu0 0.0
        %819 = vmatprep.subr.mxu0 0.0
        %820 = vmatpush1.msra.mxu0 0.0
        %821 = vmatprep.subr.mxu0 0.0
        %822 = vmatpush1.msra.mxu0 0.0
        %823 = vmatprep.subr.mxu0 0.0
        %824 = vmatpush1.msra.mxu0 0.0
        %825 = vmatprep.subr.mxu0 0.0
        %826 = vmatpush1.msra.mxu0 0.0
        %827 = vmatprep.subr.mxu0 0.0
        %828 = vmatpush1.msra.mxu0 0.0
        %829 = vmatprep.subr.mxu0 0.0
        %830 = vmatpush1.msra.mxu0 0.0
        %831 = vmatprep.subr.mxu0 0.0
        %832 = vmatpush1.msra.mxu0 0.0
        %833 = vmatprep.subr.mxu0 0.0
        %834 = vmatpush1.msra.mxu0 0.0
        %835 = vmatprep.subr.mxu0 0.0
        %836 = vmatpush1.msra.mxu0 0.0
        %837 = vmatprep.subr.mxu0 0.0
        %838 = vmatpush1.msra.mxu0 0.0
        %839 = vmatprep.subr.mxu0 0.0
        %840 = vmatpush1.msra.mxu0 0.0
        %841 = vmatprep.subr.mxu0 0.0
        %842 = vmatpush1.msra.mxu0 0.0
        %843 = vmatprep.subr.mxu0 0.0
        %844 = vmatpush1.msra.mxu0 0.0
        %845 = vmatprep.subr.mxu0 0.0
        %846 = vmatpush1.msra.mxu0 0.0
        %847 = vmatprep.subr.mxu0 0.0
        %848 = vmatpush1.msra.mxu0 0.0
        %849 = vmatprep.mubr.f32.mxu0 0.0
        %850 = vmatmul.mubr.f32.gmra.mrb[0].mxu0 %v774
        %v851 = vpop.f32.mrb[0].mxu0
        %v852 = vadd.f32 %v751, %v851
        %v853 = vpop.f32.mrb[0].mxu0
        %v854 = vadd.f32 %v753, %v853
        %855 = vmatprep.mubr.f32.mxu0 0.0
        %856 = vmatmul.mubr.f32.gmra.mrb[0].mxu0 %v777
        %v857 = vpop.f32.mrb[0].mxu0
        %v858 = vadd.f32 %v757, %v857
        %v859 = vpop.f32.mrb[0].mxu0
        %v860 = vadd.f32 %v759, %v859
        %861 = vmatprep.mubr.f32.mxu0 0.0
        %862 = vmatmul.mubr.f32.gmra.mrb[0].mxu0 %v780
        %v863 = vpop.f32.mrb[0].mxu0
        %v864 = vadd.f32 %v763, %v863
        %v865 = vpop.f32.mrb[0].mxu0
        %v866 = vadd.f32 %v765, %v865
        %867 = vmatprep.mubr.f32.mxu0 0.0
        %868 = vmatmul.mubr.f32.gmra.mrb[0].mxu0 %v783
        %v869 = vpop.f32.mrb[0].mxu0
        %v870 = vadd.f32 %v769, %v869
        %v871 = vpop.f32.mrb[0].mxu0
        %v872 = vadd.f32 %v771, %v871
        %873 = vdwg.mxu0
        %s874 = scalar_lea.vmem [#allocation5], 544
        %v875 = vld [vmem:[%s874] sm:$0xff]
        %v876 = vld [vmem:[%s874 + $0x8] sm:$0xff]
        %v877 = vld [vmem:[%s874 + $0x10] sm:$0xff]
        %v878 = vld [vmem:[%s874 + $0x18] sm:$0xff]
        %v879 = vld [vmem:[%s874 + $0x20] sm:$0xff]
        %v880 = vld [vmem:[%s874 + $0x28] sm:$0xff]
        %v881 = vld [vmem:[%s874 + $0x30] sm:$0xff]
        %v882 = vld [vmem:[%s874 + $0x38] sm:$0xff]
        %v883 = vld [vmem:[%s874 + $0x40] sm:$0xff]
        %v884 = vld [vmem:[%s874 + $0x48] sm:$0xff]
        %v885 = vld [vmem:[%s874 + $0x50] sm:$0xff]
        %v886 = vld [vmem:[%s874 + $0x58] sm:$0xff]
        %v887 = vld [vmem:[%s874 + $0x60] sm:$0xff]
        %v888 = vld [vmem:[%s874 + $0x68] sm:$0xff]
        %v889 = vld [vmem:[%s874 + $0x70] sm:$0xff]
        %v890 = vld [vmem:[%s874 + $0x78] sm:$0xff]
        %v891 = vld [vmem:[%s874 + $0x80] sm:$0xff]
        %v892 = vld [vmem:[%s874 + $0x88] sm:$0xff]
        %v893 = vld [vmem:[%s874 + $0x90] sm:$0xff]
        %v894 = vld [vmem:[%s874 + $0x98] sm:$0xff]
        %v895 = vld [vmem:[%s874 + $0xa0] sm:$0xff]
        %v896 = vld [vmem:[%s874 + $0xa8] sm:$0xff]
        %v897 = vld [vmem:[%s874 + $0xb0] sm:$0xff]
        %v898 = vld [vmem:[%s874 + $0xb8] sm:$0xff]
        %v899 = vld [vmem:[%s874 + $0xc0] sm:$0xff]
        %v900 = vld [vmem:[%s874 + $0xc8] sm:$0xff]
        %v901 = vld [vmem:[%s874 + $0xd0] sm:$0xff]
        %v902 = vld [vmem:[%s874 + $0xd8] sm:$0xff]
        %v903 = vld [vmem:[%s874 + $0xe0] sm:$0xff]
        %v904 = vld [vmem:[%s874 + $0xe8] sm:$0xff]
        %v905 = vld [vmem:[%s874 + $0xf0] sm:$0xff]
        %v906 = vld [vmem:[%s874 + $0xf8] sm:$0xff]
        %v907 = vld [vmem:[%s874 + $0x100] sm:$0xff]
        %v908 = vld [vmem:[%s874 + $0x108] sm:$0xff]
        %909 = vmatprep.subr.mxu0 %v876
        %910 = vmatpush1.msra.mxu0 %v875
        %911 = vmatprep.subr.mxu0 %v878
        %912 = vmatpush1.msra.mxu0 %v877
        %913 = vmatprep.subr.mxu0 %v880
        %914 = vmatpush1.msra.mxu0 %v879
        %915 = vmatprep.subr.mxu0 %v882
        %916 = vmatpush1.msra.mxu0 %v881
        %917 = vmatprep.subr.mxu0 %v884
        %918 = vmatpush1.msra.mxu0 %v883
        %919 = vmatprep.subr.mxu0 %v886
        %920 = vmatpush1.msra.mxu0 %v885
        %921 = vmatprep.subr.mxu0 %v888
        %922 = vmatpush1.msra.mxu0 %v887
        %923 = vmatprep.subr.mxu0 %v890
        %924 = vmatpush1.msra.mxu0 %v889
        %925 = vmatprep.subr.mxu0 %v892
        %926 = vmatpush1.msra.mxu0 %v891
        %927 = vmatprep.subr.mxu0 %v894
        %928 = vmatpush1.msra.mxu0 %v893
        %929 = vmatprep.subr.mxu0 %v896
        %930 = vmatpush1.msra.mxu0 %v895
        %931 = vmatprep.subr.mxu0 %v898
        %932 = vmatpush1.msra.mxu0 %v897
        %933 = vmatprep.subr.mxu0 %v900
        %934 = vmatpush1.msra.mxu0 %v899
        %935 = vmatprep.subr.mxu0 %v902
        %936 = vmatpush1.msra.mxu0 %v901
        %937 = vmatprep.subr.mxu0 %v904
        %938 = vmatpush1.msra.mxu0 %v903
        %939 = vmatprep.subr.mxu0 %v906
        %940 = vmatpush1.msra.mxu0 %v905
        %941 = vmatprep.subr.mxu0 %v908
        %942 = vmatpush1.msra.mxu0 %v907
        %943 = vmatprep.subr.mxu0 0.0
        %944 = vmatpush1.msra.mxu0 0.0
        %945 = vmatprep.subr.mxu0 0.0
        %946 = vmatpush1.msra.mxu0 0.0
        %947 = vmatprep.subr.mxu0 0.0
        %948 = vmatpush1.msra.mxu0 0.0
        %949 = vmatprep.subr.mxu0 0.0
        %950 = vmatpush1.msra.mxu0 0.0
        %951 = vmatprep.subr.mxu0 0.0
        %952 = vmatpush1.msra.mxu0 0.0
        %953 = vmatprep.subr.mxu0 0.0
        %954 = vmatpush1.msra.mxu0 0.0
        %955 = vmatprep.subr.mxu0 0.0
        %956 = vmatpush1.msra.mxu0 0.0
        %957 = vmatprep.subr.mxu0 0.0
        %958 = vmatpush1.msra.mxu0 0.0
        %959 = vmatprep.subr.mxu0 0.0
        %960 = vmatpush1.msra.mxu0 0.0
        %961 = vmatprep.subr.mxu0 0.0
        %962 = vmatpush1.msra.mxu0 0.0
        %963 = vmatprep.subr.mxu0 0.0
        %964 = vmatpush1.msra.mxu0 0.0
        %965 = vmatprep.subr.mxu0 0.0
        %966 = vmatpush1.msra.mxu0 0.0
        %967 = vmatprep.subr.mxu0 0.0
        %968 = vmatpush1.msra.mxu0 0.0
        %969 = vmatprep.subr.mxu0 0.0
        %970 = vmatpush1.msra.mxu0 0.0
        %971 = vmatprep.subr.mxu0 0.0
        %972 = vmatpush1.msra.mxu0 0.0
        %973 = vmatprep.mubr.f32.mxu0 %v468
        %974 = vmatmul.mubr.f32.gmra.mrb[0].mxu0 %v422
        %v975 = vpop.f32.mrb[0].mxu0
        %v976 = vadd.f32 0.0, %v975
        %v977 = vpop.f32.mrb[0].mxu0
        %v978 = vadd.f32 0.0, %v977
        %979 = vmatprep.mubr.f32.mxu0 %v471
        %980 = vmatmul.mubr.f32.gmra.mrb[0].mxu0 %v428
        %v981 = vpop.f32.mrb[0].mxu0
        %v982 = vadd.f32 0.0, %v981
        %v983 = vpop.f32.mrb[0].mxu0
        %v984 = vadd.f32 0.0, %v983
        %985 = vdwg.mxu0
        %s986 = scalar_lea.vmem %s2, 64
        %v987 = vld [vmem:[%s986] sm:$0xff]
        %v988 = vld [vmem:[%s986 + $0x8] sm:$0xff]
        %v989 = vld [vmem:[%s986 + $0x10] sm:$0xff]
        %v990 = vld [vmem:[%s986 + $0x18] sm:$0xff]
        %v992 = vsel %vm671, %v987, 0
        %v995 = vsel %vm671, %v988, 0
        %v998 = vsel %vm671, %v989, 0
        %v1001 = vsel %vm671, %v990, 0
        %1003 = vmatprep.subr.mxu0 %v978
        %1004 = vmatpush1.msra.mxu0 %v976
        %1005 = vmatprep.subr.mxu0 %v984
        %1006 = vmatpush1.msra.mxu0 %v982
        %1007 = vmatprep.subr.mxu0 0.0
        %1008 = vmatpush1.msra.mxu0 0.0
        %1009 = vmatprep.subr.mxu0 0.0
        %1010 = vmatpush1.msra.mxu0 0.0
        %1011 = vmatprep.subr.mxu0 0.0
        %1012 = vmatpush1.msra.mxu0 0.0
        %1013 = vmatprep.subr.mxu0 0.0
        %1014 = vmatpush1.msra.mxu0 0.0
        %1015 = vmatprep.subr.mxu0 0.0
        %1016 = vmatpush1.msra.mxu0 0.0
        %1017 = vmatprep.subr.mxu0 0.0
        %1018 = vmatpush1.msra.mxu0 0.0
        %1019 = vmatprep.subr.mxu0 0.0
        %1020 = vmatpush1.msra.mxu0 0.0
        %1021 = vmatprep.subr.mxu0 0.0
        %1022 = vmatpush1.msra.mxu0 0.0
        %1023 = vmatprep.subr.mxu0 0.0
        %1024 = vmatpush1.msra.mxu0 0.0
        %1025 = vmatprep.subr.mxu0 0.0
        %1026 = vmatpush1.msra.mxu0 0.0
        %1027 = vmatprep.subr.mxu0 0.0
        %1028 = vmatpush1.msra.mxu0 0.0
        %1029 = vmatprep.subr.mxu0 0.0
        %1030 = vmatpush1.msra.mxu0 0.0
        %1031 = vmatprep.subr.mxu0 0.0
        %1032 = vmatpush1.msra.mxu0 0.0
        %1033 = vmatprep.subr.mxu0 0.0
        %1034 = vmatpush1.msra.mxu0 0.0
        %1035 = vmatprep.subr.mxu0 0.0
        %1036 = vmatpush1.msra.mxu0 0.0
        %1037 = vmatprep.subr.mxu0 0.0
        %1038 = vmatpush1.msra.mxu0 0.0
        %1039 = vmatprep.subr.mxu0 0.0
        %1040 = vmatpush1.msra.mxu0 0.0
        %1041 = vmatprep.subr.mxu0 0.0
        %1042 = vmatpush1.msra.mxu0 0.0
        %1043 = vmatprep.subr.mxu0 0.0
        %1044 = vmatpush1.msra.mxu0 0.0
        %1045 = vmatprep.subr.mxu0 0.0
        %1046 = vmatpush1.msra.mxu0 0.0
        %1047 = vmatprep.subr.mxu0 0.0
        %1048 = vmatpush1.msra.mxu0 0.0
        %1049 = vmatprep.subr.mxu0 0.0
        %1050 = vmatpush1.msra.mxu0 0.0
        %1051 = vmatprep.subr.mxu0 0.0
        %1052 = vmatpush1.msra.mxu0 0.0
        %1053 = vmatprep.subr.mxu0 0.0
        %1054 = vmatpush1.msra.mxu0 0.0
        %1055 = vmatprep.subr.mxu0 0.0
        %1056 = vmatpush1.msra.mxu0 0.0
        %1057 = vmatprep.subr.mxu0 0.0
        %1058 = vmatpush1.msra.mxu0 0.0
        %1059 = vmatprep.subr.mxu0 0.0
        %1060 = vmatpush1.msra.mxu0 0.0
        %1061 = vmatprep.subr.mxu0 0.0
        %1062 = vmatpush1.msra.mxu0 0.0
        %1063 = vmatprep.subr.mxu0 0.0
        %1064 = vmatpush1.msra.mxu0 0.0
        %1065 = vmatprep.subr.mxu0 0.0
        %1066 = vmatpush1.msra.mxu0 0.0
        %1067 = vmatprep.mubr.f32.mxu0 0.0
        %1068 = vmatmul.mubr.f32.gmra.mrb[0].mxu0 %v992
        %v1069 = vpop.f32.mrb[0].mxu0
        %v1070 = vadd.f32 0.0, %v1069
        %v1071 = vpop.f32.mrb[0].mxu0
        %v1072 = vadd.f32 0.0, %v1071
        %1073 = vmatprep.mubr.f32.mxu0 0.0
        %1074 = vmatmul.mubr.f32.gmra.mrb[0].mxu0 %v995
        %v1075 = vpop.f32.mrb[0].mxu0
        %v1076 = vadd.f32 0.0, %v1075
        %v1077 = vpop.f32.mrb[0].mxu0
        %v1078 = vadd.f32 0.0, %v1077
        %1079 = vmatprep.mubr.f32.mxu0 0.0
        %1080 = vmatmul.mubr.f32.gmra.mrb[0].mxu0 %v998
        %v1081 = vpop.f32.mrb[0].mxu0
        %v1082 = vadd.f32 0.0, %v1081
        %v1083 = vpop.f32.mrb[0].mxu0
        %v1084 = vadd.f32 0.0, %v1083
        %1085 = vmatprep.mubr.f32.mxu0 0.0
        %1086 = vmatmul.mubr.f32.gmra.mrb[0].mxu0 %v1001
        %v1087 = vpop.f32.mrb[0].mxu0
        %v1088 = vadd.f32 0.0, %v1087
        %v1089 = vpop.f32.mrb[0].mxu0
        %v1090 = vadd.f32 0.0, %v1089
        %1091 = vdwg.mxu0
        %v1092 = vadd.f32 %v852, %v1070
        %v1093 = vadd.f32 %v854, %v1072
        %v1094 = vadd.f32 %v858, %v1076
        %v1095 = vadd.f32 %v860, %v1078
        %v1096 = vadd.f32 %v864, %v1082
        %v1097 = vadd.f32 %v866, %v1084
        %v1098 = vadd.f32 %v870, %v1088
        %v1099 = vadd.f32 %v872, %v1090
        %v1100 = vld [vmem:[%s4] sm:$0x3]
        %v1102 = vlaneseq
        %v1103 = vshrl.u32 %v1102, 7
        %v1104 = vsub.s32 0, %v1103
        %v1105 = vrot.slane %v1100, %v1104
        %v1106 = vlaneseq
        %v1107 = vshrl.u32 %v1106, 7
        %v1108 = vsub.s32 1, %v1107
        %v1109 = vrot.slane %v1100, %v1108
        %v1112 = vadd.f32 %v1092, %v1105
        %v1113 = vadd.f32 %v1093, %v1109
        %v1114 = vadd.f32 %v1094, %v1105
        %v1115 = vadd.f32 %v1095, %v1109
        %v1116 = vadd.f32 %v1096, %v1105
        %v1117 = vadd.f32 %v1097, %v1109
        %v1118 = vadd.f32 %v1098, %v1105
        %v1119 = vadd.f32 %v1099, %v1109
        %1120 = vst [vmem:[%s315] sm:$0xff] %v1112
        %1121 = vst [vmem:[%s315 + $0x8] sm:$0xff] %v1113
        %1122 = vst [vmem:[%s315 + $0x10] sm:$0xff] %v1114
        %1123 = vst [vmem:[%s315 + $0x18] sm:$0xff] %v1115
        %1124 = vst [vmem:[%s315 + $0x20] sm:$0xff] %v1116
        %1125 = vst [vmem:[%s315 + $0x28] sm:$0xff] %v1117
        %1126 = vst [vmem:[%s315 + $0x30] sm:$0xff] %v1118
        %1127 = vst [vmem:[%s315 + $0x38] sm:$0xff] %v1119
        %v1128 = vadd.f32 %v1112, %v1114
        %v1129 = vadd.f32 %v1128, %v1116
        %v1130 = vadd.f32 %v1129, %v1118
        %v1131 = vrot.slane %v1130, 4
        %v1132 = vadd.f32 %v1130, %v1131
        %v1133 = vrot.slane %v1132, 2
        %v1134 = vadd.f32 %v1132, %v1133
        %v1135 = vrot.slane %v1134, 1
        %v1136 = vadd.f32 %v1134, %v1135
        %v1137 = vadd.f32 %v1113, %v1115
        %v1138 = vadd.f32 %v1137, %v1117
        %v1139 = vadd.f32 %v1138, %v1119
        %v1140 = vrot.slane %v1139, 4
        %v1141 = vadd.f32 %v1139, %v1140
        %v1142 = vrot.slane %v1141, 2
        %v1143 = vadd.f32 %v1141, %v1142
        %v1144 = vrot.slane %v1143, 1
        %v1145 = vadd.f32 %v1143, %v1144
        %v1148 = vcombine.low %v1136, %v1145
        %v1150 = vunpack.c.l.s4 1966171168
        %v1151 = vunpack.c.0.s8 %v1150
        %v1152 = vlaneseq
        %v1153 = vshrl.u32 %v1152, 7
        %v1154 = vsub.s32 %v1151, %v1153
        %v1155 = vrot.slane %v1148, %v1154
        %v1157 = vunpack.c.l.s4 1966171168
        %v1158 = vunpack.c.0.s8 %v1157
        %v1159 = vlaneseq
        %v1160 = vshrl.u32 %v1159, 7
        %v1161 = vsub.s32 %v1158, %v1160
        %v1162 = vrot.slane %v1155, %v1161
        %v1164 = vlaneseq
        %vm1165 = vcmp.ge.s32.totalorder %v1164, 0
        %vm1166 = vcmp.lt.s32.totalorder %v1164, 256
        %vm1167 = vmand %vm1165, %vm1166
        %1168 = vst.msk [vmem:[%s322] sm:$0x3] %vm1167, %v1162
        %v1169 = vmul.f32 %v1112, %v1112
        %v1170 = vmul.f32 %v1113, %v1113
        %v1171 = vmul.f32 %v1114, %v1114
        %v1172 = vmul.f32 %v1115, %v1115
        %v1173 = vmul.f32 %v1116, %v1116
        %v1174 = vmul.f32 %v1117, %v1117
        %v1175 = vmul.f32 %v1118, %v1118
        %v1176 = vmul.f32 %v1119, %v1119
        %v1177 = vadd.f32 %v1169, %v1171
        %v1178 = vadd.f32 %v1177, %v1173
        %v1179 = vadd.f32 %v1178, %v1175
        %v1180 = vrot.slane %v1179, 4
        %v1181 = vadd.f32 %v1179, %v1180
        %v1182 = vrot.slane %v1181, 2
        %v1183 = vadd.f32 %v1181, %v1182
        %v1184 = vrot.slane %v1183, 1
        %v1185 = vadd.f32 %v1183, %v1184
        %v1186 = vadd.f32 %v1170, %v1172
        %v1187 = vadd.f32 %v1186, %v1174
        %v1188 = vadd.f32 %v1187, %v1176
        %v1189 = vrot.slane %v1188, 4
        %v1190 = vadd.f32 %v1188, %v1189
        %v1191 = vrot.slane %v1190, 2
        %v1192 = vadd.f32 %v1190, %v1191
        %v1193 = vrot.slane %v1192, 1
        %v1194 = vadd.f32 %v1192, %v1193
        %v1197 = vcombine.low %v1185, %v1194
        %v1199 = vunpack.c.l.s4 1966171168
        %v1200 = vunpack.c.0.s8 %v1199
        %v1201 = vlaneseq
        %v1202 = vshrl.u32 %v1201, 7
        %v1203 = vsub.s32 %v1200, %v1202
        %v1204 = vrot.slane %v1197, %v1203
        %v1206 = vunpack.c.l.s4 1966171168
        %v1207 = vunpack.c.0.s8 %v1206
        %v1208 = vlaneseq
        %v1209 = vshrl.u32 %v1208, 7
        %v1210 = vsub.s32 %v1207, %v1209
        %v1211 = vrot.slane %v1204, %v1210
        %1213 = vst.msk [vmem:[%s329] sm:$0x3] %vm1167, %v1211
        %s1214 = sand.u32 %s147, 1
        %s1215 = scalar_lea.sflag [#allocation4], %s1214
        %s1216 = sand.u32 %s147, 1
        %s1217 = smul.addr %s1216, 64
        %s1218 = scalar_lea.vmem [#allocation7], %s1217
        %s1219 = sand.u32 %s29, 1
        %s1220 = scalar_lea.sflag [#allocation9], %s1219
        %s1221 = sand.u32 %s173, 1
        %s1222 = smul.addr %s1221, 2
        %s1223 = scalar_lea.vmem [#allocation8], %s1222
        %s1224 = sand.u32 %s29, 1
        %s1225 = scalar_lea.sflag [#allocation9], %s1224
        %s1226 = sand.u32 %s199, 1
        %s1227 = smul.addr %s1226, 2
        %s1228 = scalar_lea.vmem [#allocation10], %s1227
        // Predicated region
        $region49: #{tpu_custom_call.1} parent=39 // pred_check
          %p1229 = pneg %p157
        $region50: #{tpu_custom_call.1} parent=39 // pred_check_branch
          %1231 = sbr.rel (%p1229) target = $region52
        $region51: #{tpu_custom_call.1} parent=39 // pred_region
          %s1233 = ssub.s32 1024, 1024
          %1234 = vsyncadd %s1215, %s1233
          %s1235 = smul.addr %s29, 8
          %s1236 = smul.addr %s1235, 128
          %s1237 = scalar_lea.hbm %s5, %s1236
          %s1238 = sshll.u32 %s1218, 4
          %s1239 = int_to_ptr.vmem [resolvable:$true] %s1238
          %1244 = dma.vmem_to_hbm [thread:$0]  %s1239, 1024, %s1237, %s1215, 256, 256, 16
        $region52: #{tpu_custom_call.1} parent=39 // pred_fallthru
          _
        // Predicated region
        $region53: #{tpu_custom_call.1} parent=39 // pred_check
          %p1245 = pneg %p183
        $region54: #{tpu_custom_call.1} parent=39 // pred_check_branch
          %1247 = sbr.rel (%p1245) target = $region56
        $region55: #{tpu_custom_call.1} parent=39 // pred_region
          %s1249 = ssub.s32 32, 32
          %1250 = vsyncadd %s1220, %s1249
          %s1251 = smul.addr %s29, 2
          %s1252 = smul.addr %s1251, 16
          %s1253 = scalar_lea.hbm %s6, %s1252
          %s1255 = sshll.u32 %s1223, 4
          %s1256 = int_to_ptr.vmem [resolvable:$true] %s1255
          %1258 = dma.vmem_to_hbm [thread:$0]  %s1256, 32, %s1253, %s1220
        $region56: #{tpu_custom_call.1} parent=39 // pred_fallthru
          _
        // Predicated region
        $region57: #{tpu_custom_call.1} parent=39 // pred_check
          %p1259 = pneg %p209
        $region58: #{tpu_custom_call.1} parent=39 // pred_check_branch
          %1261 = sbr.rel (%p1259) target = $region60
        $region59: #{tpu_custom_call.1} parent=39 // pred_region
          %s1263 = ssub.s32 32, 32
          %1264 = vsyncadd %s1225, %s1263
          %s1265 = smul.addr %s29, 2
          %s1266 = smul.addr %s1265, 16
          %s1267 = scalar_lea.hbm %s7, %s1266
          %s1269 = sshll.u32 %s1228, 4
          %s1270 = int_to_ptr.vmem [resolvable:$true] %s1269
          %1272 = dma.vmem_to_hbm [thread:$0]  %s1270, 32, %s1267, %s1225
        $region60: #{tpu_custom_call.1} parent=39 // pred_fallthru
          _
      $region40: #{tpu_custom_call.1} parent=5 // pred_fallthru
        _
      %p1273 = scmp.le.s32.totalorder 2, %s24
      // Predicated region
      $region61: #{tpu_custom_call.1} parent=5 // pred_check
        %p1274 = pneg %p1273
      $region62: #{tpu_custom_call.1} parent=5 // pred_check_branch
        %1276 = sbr.rel (%p1274) target = $region64
      $region63: #{tpu_custom_call.1} parent=5 // pred_region
        %s1277 = ssub.s32 %s24, 2
        // Predicated region
        $region65: #{tpu_custom_call.1} parent=63 // pred_check
          %p1278 = pneg %p163
        $region66: #{tpu_custom_call.1} parent=63 // pred_check_branch
          %1280 = sbr.rel (%p1278) target = $region68
        $region67: #{tpu_custom_call.1} parent=63 // pred_region
          %s1281 = sand.u32 %s148, 1
          %s1282 = scalar_lea.sflag [#allocation4], %s1281
          %s1283 = sand.u32 %s148, 1
          %s1284 = smul.addr %s1283, 64
          %s1285 = scalar_lea.vmem [#allocation7], %s1284
          %1286 = dma.done %s1282, 1024
        $region68: #{tpu_custom_call.1} parent=63 // pred_fallthru
          _
        // Predicated region
        $region69: #{tpu_custom_call.1} parent=63 // pred_check
          %p1287 = pneg %p189
        $region70: #{tpu_custom_call.1} parent=63 // pred_check_branch
          %1289 = sbr.rel (%p1287) target = $region72
        $region71: #{tpu_custom_call.1} parent=63 // pred_region
          %s1290 = sand.u32 %s30, 1
          %s1291 = scalar_lea.sflag [#allocation9], %s1290
          %s1292 = sand.u32 %s174, 1
          %s1293 = smul.addr %s1292, 2
          %s1294 = scalar_lea.vmem [#allocation8], %s1293
          %1295 = dma.done %s1291, 32
        $region72: #{tpu_custom_call.1} parent=63 // pred_fallthru
          _
        // Predicated region
        $region73: #{tpu_custom_call.1} parent=63 // pred_check
          %p1296 = pneg %p215
        $region74: #{tpu_custom_call.1} parent=63 // pred_check_branch
          %1298 = sbr.rel (%p1296) target = $region76
        $region75: #{tpu_custom_call.1} parent=63 // pred_region
          %s1299 = sand.u32 %s30, 1
          %s1300 = scalar_lea.sflag [#allocation9], %s1299
          %s1301 = sand.u32 %s200, 1
          %s1302 = smul.addr %s1301, 2
          %s1303 = scalar_lea.vmem [#allocation10], %s1302
          %1304 = dma.done %s1300, 32
        $region76: #{tpu_custom_call.1} parent=63 // pred_fallthru
          _
      $region64: #{tpu_custom_call.1} parent=5 // pred_fallthru
        _
    $region6: #{tpu_custom_call.1} parent=1 // loop_footer
      %s28 = sadd.s32 1, %s24
    $region7: #{tpu_custom_call.1} parent=1 // loop_footer_branch
      %23 = sbr.rel target = $region3
    $region8: #{tpu_custom_call.1} parent=1 // loop_exit
      _
    %1305 = vsyncpa [#allocation3], 1
    %s1306 = scalar_lea.sflag [#allocation3], 1
    %1307 = vsyncpa %s1306, 1
    %1308 = vsyncpa [#allocation6], 1
    %1309 = vsyncpa [#allocation4], 1
    %s1310 = scalar_lea.sflag [#allocation4], 1
    %1311 = vsyncpa %s1310, 1
    %1312 = vsyncpa [#allocation9], 1
    %s1313 = scalar_lea.sflag [#allocation9], 1
    %1314 = vsyncpa %s1313, 1

</llo_original>
